<compile_context>
chip_gen: v7x
topology: tpu7x:2x2x1
jax: 0.10.0
libtpu: 0.0.40
codegen_flags: <defaults>
</compile_context>

<pallas_src>
import jax
import jax.numpy as jnp
from jax import lax
from jax.experimental import pallas as pl
from jax.experimental.pallas import tpu as pltpu

# ---- model dims (small, consistent with the module's forward) ----
BATCH = 2
SEQ = 8
HIDDEN = 32
NUM_HEADS = 4
HEAD_DIM = HIDDEN // NUM_HEADS
FFN = 4 * HIDDEN
ROWS = BATCH * SEQ
LN_EPS = 1e-5
LANES = 128


def _layernorm(x, gamma, beta):
    mu = jnp.mean(x, axis=-1, keepdims=True)
    var = jnp.mean((x - mu) ** 2, axis=-1, keepdims=True)
    return (x - mu) * lax.rsqrt(var + LN_EPS) * gamma + beta


def _gelu_exact(x):
    # nn.GELU() default = exact erf form (kept to match PyTorch semantics)
    return 0.5 * x * (1.0 + lax.erf(x * (2.0 ** -0.5)))


def transformer_block_kernel(x_ref, wA_ref, w2_ref, p_ref, out_ref):
    D, Dh, H, S, B = HIDDEN, HEAD_DIM, NUM_HEADS, SEQ, BATCH

    x = x_ref[...]                                   # (ROWS, D)
    wA = wA_ref[...]                                 # (D, 4D + FFN) = (32, 256)
    p = p_ref[...]                                   # (8, 128) packed params

    ln1_g, ln1_b = p[0:1, :D], p[1:2, :D]
    bqkv = p[2:3, :3 * D]                            # bq*scale | bk | bv
    bproj = p[3:4, :D]
    ln2_g, ln2_b = p[4:5, :D], p[5:6, :D]
    b1 = p[6:7, :FFN]
    b2 = p[7:8, :D]

    wqkv = wA[:, :3 * D]                             # Wq*scale | Wk | Wv
    wproj = wA[:, 3 * D:4 * D]
    w1 = wA[:, 4 * D:4 * D + FFN]

    # ---- LN1 + fused QKV projection (one (ROWS,D)@(D,3D) matmul) ----
    h = _layernorm(x, ln1_g, ln1_b)
    qkv = jnp.dot(h, wqkv, preferred_element_type=jnp.float32) + bqkv

    # ---- multi-head attention on static 2-D lane/sublane slices ----
    # The QK scale is already folded into Wq/bq.  Head contexts are re-packed
    # along lanes so the output projection is a single matmul over the slab.
    ctx_rows = []
    for b in range(B):
        r0 = b * S
        head_ctx = []
        for hh in range(H):
            c0 = hh * Dh
            qbh = qkv[r0:r0 + S, c0:c0 + Dh]
            kbh = qkv[r0:r0 + S, D + c0:D + c0 + Dh]
            vbh = qkv[r0:r0 + S, 2 * D + c0:2 * D + c0 + Dh]
            # scores = q @ k^T without materializing a transpose
            s = lax.dot_general(qbh, kbh, (((1,), (1,)), ((), ())),
                                preferred_element_type=jnp.float32)
            # numerically-safe exact softmax (row-max + exact divide)
            s = s - jnp.max(s, axis=-1, keepdims=True)
            ps = jnp.exp(s)
            ps = ps / jnp.sum(ps, axis=-1, keepdims=True)
            head_ctx.append(jnp.dot(ps, vbh, preferred_element_type=jnp.float32))
        ctx_rows.append(jnp.concatenate(head_ctx, axis=1))          # (S, D)
    ctx = ctx_rows[0] if B == 1 else jnp.concatenate(ctx_rows, axis=0)  # (ROWS, D)

    # ---- single output projection for the whole slab ----
    attn_out = jnp.dot(ctx, wproj, preferred_element_type=jnp.float32) + bproj
    # attn_dropout / proj_dropout are identity in eval mode
    res1 = attn_out + x

    # ---- LN2 + MLP + residual (hidden_dropout = identity) ----
    h2 = _layernorm(res1, ln2_g, ln2_b)
    ff = jnp.dot(h2, w1, preferred_element_type=jnp.float32) + b1
    ff = _gelu_exact(ff)
    ff = jnp.dot(ff, w2_ref[...], preferred_element_type=jnp.float32) + b2
    out_ref[...] = (ff + res1).astype(out_ref.dtype)


def _pad_row(v, width=LANES):
    v = v.reshape(1, -1)
    return jnp.pad(v, ((0, 0), (0, width - v.shape[1])))


def transformer_block(x, params):
    """Run the block as a single collapsed-grid pallas_call (best on all of
    v5e/v6e/v7x at this size).  Weights/params are packed host-side (constant-
    folded under jit) so the kernel has only 4 inputs."""
    B, S, D = x.shape
    assert (B, S, D) == (BATCH, SEQ, HIDDEN)
    scale = float(HEAD_DIM) ** (-0.5)

    # Fused, lane-dense weight slab: Wq*scale | Wk | Wv | Wproj | W1 -> (D, 256)
    wA = jnp.concatenate(
        [params["wq"] * scale, params["wk"], params["wv"],
         params["wproj"], params["w1"]], axis=1)

    # Packed (8,128) param slab: one vreg, one DMA for all small params.
    bqkv = jnp.concatenate(
        [params["bq"] * scale, params["bk"], params["bv"]], axis=1)
    pslab = jnp.concatenate([
        _pad_row(params["ln1_g"]), _pad_row(params["ln1_b"]),
        _pad_row(bqkv), _pad_row(params["bproj"]),
        _pad_row(params["ln2_g"]), _pad_row(params["ln2_b"]),
        _pad_row(params["b1"]), _pad_row(params["b2"]),
    ], axis=0)

    x2 = x.reshape(ROWS, D)

    flops = (2 * ROWS * (D * 3 * D + D * D + D * FFN + FFN * D)
             + 4 * BATCH * NUM_HEADS * SEQ * SEQ * HEAD_DIM)
    transcendentals = ROWS * FFN + BATCH * NUM_HEADS * SEQ * SEQ + 2 * ROWS
    bytes_accessed = 4 * (2 * ROWS * D + wA.size + FFN * D + 8 * LANES)

    out = pl.pallas_call(
        transformer_block_kernel,
        out_shape=jax.ShapeDtypeStruct((ROWS, D), jnp.float32),
        grid=(1,),
        in_specs=[
            pl.BlockSpec((ROWS, D), lambda i: (0, 0)),              # x slab
            pl.BlockSpec((D, 4 * D + FFN), lambda i: (0, 0)),       # fused weights
            pl.BlockSpec((FFN, D), lambda i: (0, 0)),               # W2
            pl.BlockSpec((8, LANES), lambda i: (0, 0)),             # packed params
        ],
        out_specs=pl.BlockSpec((ROWS, D), lambda i: (0, 0)),
        cost_estimate=pl.CostEstimate(flops=flops,
                                      transcendentals=transcendentals,
                                      bytes_accessed=bytes_accessed),
        compiler_params=pltpu.CompilerParams(
            dimension_semantics=("arbitrary",)),
        # NOTE: when HIDDEN/FFN are scaled to production sizes, set
        # vmem_limit_bytes here and tile the FFN (lane) axis instead of batch.
    )(x2, wA, params["w2"], pslab)
    return out.reshape(B, S, D)


def reference_block(x, p):
    """Pure-JAX reference mirroring the PyTorch forward (eval mode)."""
    def ln(y, g, b):
        mu = jnp.mean(y, -1, keepdims=True)
        var = jnp.mean((y - mu) ** 2, -1, keepdims=True)
        return (y - mu) / jnp.sqrt(var + LN_EPS) * g + b

    res = x
    h = ln(x, p["ln1_g"][0], p["ln1_b"][0])
    q = h @ p["wq"] + p["bq"][0]
    k = h @ p["wk"] + p["bk"][0]
    v = h @ p["wv"] + p["bv"][0]
    B, S, D = x.shape
    qh = q.reshape(B, S, NUM_HEADS, HEAD_DIM).transpose(0, 2, 1, 3)
    kh = k.reshape(B, S, NUM_HEADS, HEAD_DIM).transpose(0, 2, 1, 3)
    vh = v.reshape(B, S, NUM_HEADS, HEAD_DIM).transpose(0, 2, 1, 3)
    scores = jnp.einsum("bhqd,bhkd->bhqk", qh * (HEAD_DIM ** -0.5), kh)
    attn = jax.nn.softmax(scores, axis=-1)
    ctx = jnp.einsum("bhqk,bhkd->bhqd", attn, vh)
    ctx = ctx.transpose(0, 2, 1, 3).reshape(B, S, D)
    out = ctx @ p["wproj"] + p["bproj"][0]
    out = out + res
    res2 = out
    h2 = ln(out, p["ln2_g"][0], p["ln2_b"][0])
    ff = h2 @ p["w1"] + p["b1"][0]
    ff = 0.5 * ff * (1.0 + lax.erf(ff / jnp.sqrt(2.0)))
    ff = ff @ p["w2"] + p["b2"][0]
    return ff + res2


def init_params(key):
    ks = jax.random.split(key, 12)
    s = 0.02
    return {
        "ln1_g": jnp.ones((1, HIDDEN), jnp.float32),
        "ln1_b": jnp.zeros((1, HIDDEN), jnp.float32),
        "wq": s * jax.random.normal(ks[0], (HIDDEN, HIDDEN), jnp.float32),
        "bq": s * jax.random.normal(ks[1], (1, HIDDEN), jnp.float32),
        "wk": s * jax.random.normal(ks[2], (HIDDEN, HIDDEN), jnp.float32),
        "bk": s * jax.random.normal(ks[3], (1, HIDDEN), jnp.float32),
        "wv": s * jax.random.normal(ks[4], (HIDDEN, HIDDEN), jnp.float32),
        "bv": s * jax.random.normal(ks[5], (1, HIDDEN), jnp.float32),
        "wproj": s * jax.random.normal(ks[6], (HIDDEN, HIDDEN), jnp.float32),
        "bproj": s * jax.random.normal(ks[7], (1, HIDDEN), jnp.float32),
        "ln2_g": jnp.ones((1, HIDDEN), jnp.float32),
        "ln2_b": jnp.zeros((1, HIDDEN), jnp.float32),
        "w1": s * jax.random.normal(ks[8], (HIDDEN, FFN), jnp.float32),
        "b1": s * jax.random.normal(ks[9], (1, FFN), jnp.float32),
        "w2": s * jax.random.normal(ks[10], (FFN, HIDDEN), jnp.float32),
        "b2": s * jax.random.normal(ks[11], (1, HIDDEN), jnp.float32),
    }


if __name__ == "__main__":
    key = jax.random.PRNGKey(0)
    kx, kp = jax.random.split(key)
    x = jax.random.normal(kx, (BATCH, SEQ, HIDDEN), jnp.float32)
    params = init_params(kp)

    out = transformer_block(x, params)
    out = jax.block_until_ready(out)

    ref = jax.block_until_ready(reference_block(x, params))
    assert out.shape == (BATCH, SEQ, HIDDEN)
    assert jnp.allclose(out, ref, rtol=1e-4, atol=1e-4), (
        float(jnp.max(jnp.abs(out - ref))))
    print("KERNEL_OK")
</pallas_src>

<mosaic_0001>
module attributes {stable_mosaic.version = 11 : i64} {
  func.func @transformer_block_kernel(%arg0: i32, %arg1: memref<16x32xf32, #tpu.memory_space<vmem>>, %arg2: memref<32x256xf32, #tpu.memory_space<vmem>>, %arg3: memref<128x32xf32, #tpu.memory_space<vmem>>, %arg4: memref<8x128xf32, #tpu.memory_space<vmem>>, %arg5: memref<16x32xf32, #tpu.memory_space<vmem>>) attributes {dimension_semantics = [#tpu.dimension_semantics<arbitrary>], iteration_bounds = array<i64: 1>, scalar_prefetch = 0 : i64, scratch_operands = 0 : i64, tpu.core_type = #tpu.core_type<tc>, window_params = [{pipeline_mode = #tpu.pipeline_mode<synchronous>, transform_indices = @transform_0, window_bounds = array<i64: 16, 32>}, {pipeline_mode = #tpu.pipeline_mode<synchronous>, transform_indices = @transform_1, window_bounds = array<i64: 32, 256>}, {pipeline_mode = #tpu.pipeline_mode<synchronous>, transform_indices = @transform_2, window_bounds = array<i64: 128, 32>}, {pipeline_mode = #tpu.pipeline_mode<synchronous>, transform_indices = @transform_3, window_bounds = array<i64: 8, 128>}, {pipeline_mode = #tpu.pipeline_mode<synchronous>, transform_indices = @transform_4, window_bounds = array<i64: 16, 32>}]} {
    %c0 = arith.constant 0 : index
    %c0_0 = arith.constant 0 : index
    %0 = vector.load %arg1[%c0, %c0_0] : memref<16x32xf32, #tpu.memory_space<vmem>>, vector<16x32xf32>
    %c0_1 = arith.constant 0 : index
    %c0_2 = arith.constant 0 : index
    %1 = vector.load %arg2[%c0_1, %c0_2] : memref<32x256xf32, #tpu.memory_space<vmem>>, vector<32x256xf32>
    %c0_3 = arith.constant 0 : index
    %c0_4 = arith.constant 0 : index
    %2 = vector.load %arg4[%c0_3, %c0_4] : memref<8x128xf32, #tpu.memory_space<vmem>>, vector<8x128xf32>
    %3 = vector.extract_strided_slice %2 {offsets = [0, 0], sizes = [1, 32], strides = [1, 1]} : vector<8x128xf32> to vector<1x32xf32>
    %4 = vector.extract_strided_slice %2 {offsets = [1, 0], sizes = [1, 32], strides = [1, 1]} : vector<8x128xf32> to vector<1x32xf32>
    %5 = vector.extract_strided_slice %2 {offsets = [2, 0], sizes = [1, 96], strides = [1, 1]} : vector<8x128xf32> to vector<1x96xf32>
    %6 = vector.extract_strided_slice %2 {offsets = [3, 0], sizes = [1, 32], strides = [1, 1]} : vector<8x128xf32> to vector<1x32xf32>
    %7 = vector.extract_strided_slice %2 {offsets = [4, 0], sizes = [1, 32], strides = [1, 1]} : vector<8x128xf32> to vector<1x32xf32>
    %8 = vector.extract_strided_slice %2 {offsets = [5, 0], sizes = [1, 32], strides = [1, 1]} : vector<8x128xf32> to vector<1x32xf32>
    %9 = vector.extract_strided_slice %2 {offsets = [6, 0], sizes = [1, 128], strides = [1, 1]} : vector<8x128xf32> to vector<1x128xf32>
    %10 = vector.extract_strided_slice %2 {offsets = [7, 0], sizes = [1, 32], strides = [1, 1]} : vector<8x128xf32> to vector<1x32xf32>
    %11 = vector.extract_strided_slice %1 {offsets = [0, 0], sizes = [32, 96], strides = [1, 1]} : vector<32x256xf32> to vector<32x96xf32>
    %12 = vector.extract_strided_slice %1 {offsets = [0, 96], sizes = [32, 32], strides = [1, 1]} : vector<32x256xf32> to vector<32x32xf32>
    %13 = vector.extract_strided_slice %1 {offsets = [0, 128], sizes = [32, 128], strides = [1, 1]} : vector<32x256xf32> to vector<32x128xf32>
    %cst = arith.constant dense<0.000000e+00> : vector<16xf32>
    %14 = vector.multi_reduction <add>, %0, %cst [1] : vector<16x32xf32> to vector<16xf32>
    %15 = vector.shape_cast %14 : vector<16xf32> to vector<16x1xf32>
    %cst_5 = arith.constant 3.200000e+01 : f32
    %16 = vector.broadcast %cst_5 : f32 to vector<16x1xf32>
    %17 = arith.divf %15, %16 : vector<16x1xf32>
    %18 = vector.broadcast %17 : vector<16x1xf32> to vector<16x32xf32>
    %19 = arith.subf %0, %18 : vector<16x32xf32>
    %20 = arith.mulf %19, %19 : vector<16x32xf32>
    %cst_6 = arith.constant dense<0.000000e+00> : vector<16xf32>
    %21 = vector.multi_reduction <add>, %20, %cst_6 [1] : vector<16x32xf32> to vector<16xf32>
    %22 = vector.shape_cast %21 : vector<16xf32> to vector<16x1xf32>
    %cst_7 = arith.constant 3.200000e+01 : f32
    %23 = vector.broadcast %cst_7 : f32 to vector<16x1xf32>
    %24 = arith.divf %22, %23 : vector<16x1xf32>
    %25 = vector.broadcast %17 : vector<16x1xf32> to vector<16x32xf32>
    %26 = arith.subf %0, %25 : vector<16x32xf32>
    %cst_8 = arith.constant 9.99999974E-6 : f32
    %27 = vector.broadcast %cst_8 : f32 to vector<16x1xf32>
    %28 = arith.addf %24, %27 : vector<16x1xf32>
    %29 = math.rsqrt %28 : vector<16x1xf32>
    %30 = vector.broadcast %29 : vector<16x1xf32> to vector<16x32xf32>
    %31 = arith.mulf %26, %30 : vector<16x32xf32>
    %32 = vector.broadcast %3 : vector<1x32xf32> to vector<16x32xf32>
    %33 = arith.mulf %31, %32 : vector<16x32xf32>
    %34 = vector.broadcast %4 : vector<1x32xf32> to vector<16x32xf32>
    %35 = arith.addf %33, %34 : vector<16x32xf32>
    %cst_9 = arith.constant dense<0.000000e+00> : vector<16x96xf32>
    %36 = tpu.matmul %35, %11, %cst_9 {dimension_numbers = #tpu.dot_dimension_numbers<[1], [0], [0], [1], [0, 0, 1, 1], [], []>} : vector<16x32xf32>, vector<32x96xf32>, vector<16x96xf32> -> vector<16x96xf32>
    %37 = vector.broadcast %5 : vector<1x96xf32> to vector<16x96xf32>
    %38 = arith.addf %36, %37 : vector<16x96xf32>
    %39 = vector.extract_strided_slice %38 {offsets = [0, 0], sizes = [8, 8], strides = [1, 1]} : vector<16x96xf32> to vector<8x8xf32>
    %40 = vector.extract_strided_slice %38 {offsets = [0, 32], sizes = [8, 8], strides = [1, 1]} : vector<16x96xf32> to vector<8x8xf32>
    %41 = vector.extract_strided_slice %38 {offsets = [0, 64], sizes = [8, 8], strides = [1, 1]} : vector<16x96xf32> to vector<8x8xf32>
    %cst_10 = arith.constant dense<0.000000e+00> : vector<8x8xf32>
    %42 = tpu.matmul %39, %40, %cst_10 {dimension_numbers = #tpu.dot_dimension_numbers<[1], [1], [0], [0], [0, 0, 1, 0], [], []>} : vector<8x8xf32>, vector<8x8xf32>, vector<8x8xf32> -> vector<8x8xf32>
    %cst_11 = arith.constant dense<0xFF800000> : vector<8xf32>
    %43 = vector.multi_reduction <maximumf>, %42, %cst_11 [1] : vector<8x8xf32> to vector<8xf32>
    %44 = vector.shape_cast %43 : vector<8xf32> to vector<8x1xf32>
    %45 = vector.broadcast %44 : vector<8x1xf32> to vector<8x8xf32>
    %46 = arith.subf %42, %45 : vector<8x8xf32>
    %47 = math.exp %46 : vector<8x8xf32>
    %cst_12 = arith.constant dense<0.000000e+00> : vector<8xf32>
    %48 = vector.multi_reduction <add>, %47, %cst_12 [1] : vector<8x8xf32> to vector<8xf32>
    %49 = vector.shape_cast %48 : vector<8xf32> to vector<8x1xf32>
    %50 = vector.broadcast %49 : vector<8x1xf32> to vector<8x8xf32>
    %51 = arith.divf %47, %50 : vector<8x8xf32>
    %cst_13 = arith.constant dense<0.000000e+00> : vector<8x8xf32>
    %52 = tpu.matmul %51, %41, %cst_13 {dimension_numbers = #tpu.dot_dimension_numbers<[1], [0], [0], [1], [0, 0, 1, 1], [], []>} : vector<8x8xf32>, vector<8x8xf32>, vector<8x8xf32> -> vector<8x8xf32>
    %53 = vector.extract_strided_slice %38 {offsets = [0, 8], sizes = [8, 8], strides = [1, 1]} : vector<16x96xf32> to vector<8x8xf32>
    %54 = vector.extract_strided_slice %38 {offsets = [0, 40], sizes = [8, 8], strides = [1, 1]} : vector<16x96xf32> to vector<8x8xf32>
    %55 = vector.extract_strided_slice %38 {offsets = [0, 72], sizes = [8, 8], strides = [1, 1]} : vector<16x96xf32> to vector<8x8xf32>
    %cst_14 = arith.constant dense<0.000000e+00> : vector<8x8xf32>
    %56 = tpu.matmul %53, %54, %cst_14 {dimension_numbers = #tpu.dot_dimension_numbers<[1], [1], [0], [0], [0, 0, 1, 0], [], []>} : vector<8x8xf32>, vector<8x8xf32>, vector<8x8xf32> -> vector<8x8xf32>
    %cst_15 = arith.constant dense<0xFF800000> : vector<8xf32>
    %57 = vector.multi_reduction <maximumf>, %56, %cst_15 [1] : vector<8x8xf32> to vector<8xf32>
    %58 = vector.shape_cast %57 : vector<8xf32> to vector<8x1xf32>
    %59 = vector.broadcast %58 : vector<8x1xf32> to vector<8x8xf32>
    %60 = arith.subf %56, %59 : vector<8x8xf32>
    %61 = math.exp %60 : vector<8x8xf32>
    %cst_16 = arith.constant dense<0.000000e+00> : vector<8xf32>
    %62 = vector.multi_reduction <add>, %61, %cst_16 [1] : vector<8x8xf32> to vector<8xf32>
    %63 = vector.shape_cast %62 : vector<8xf32> to vector<8x1xf32>
    %64 = vector.broadcast %63 : vector<8x1xf32> to vector<8x8xf32>
    %65 = arith.divf %61, %64 : vector<8x8xf32>
    %cst_17 = arith.constant dense<0.000000e+00> : vector<8x8xf32>
    %66 = tpu.matmul %65, %55, %cst_17 {dimension_numbers = #tpu.dot_dimension_numbers<[1], [0], [0], [1], [0, 0, 1, 1], [], []>} : vector<8x8xf32>, vector<8x8xf32>, vector<8x8xf32> -> vector<8x8xf32>
    %67 = vector.extract_strided_slice %38 {offsets = [0, 16], sizes = [8, 8], strides = [1, 1]} : vector<16x96xf32> to vector<8x8xf32>
    %68 = vector.extract_strided_slice %38 {offsets = [0, 48], sizes = [8, 8], strides = [1, 1]} : vector<16x96xf32> to vector<8x8xf32>
    %69 = vector.extract_strided_slice %38 {offsets = [0, 80], sizes = [8, 8], strides = [1, 1]} : vector<16x96xf32> to vector<8x8xf32>
    %cst_18 = arith.constant dense<0.000000e+00> : vector<8x8xf32>
    %70 = tpu.matmul %67, %68, %cst_18 {dimension_numbers = #tpu.dot_dimension_numbers<[1], [1], [0], [0], [0, 0, 1, 0], [], []>} : vector<8x8xf32>, vector<8x8xf32>, vector<8x8xf32> -> vector<8x8xf32>
    %cst_19 = arith.constant dense<0xFF800000> : vector<8xf32>
    %71 = vector.multi_reduction <maximumf>, %70, %cst_19 [1] : vector<8x8xf32> to vector<8xf32>
    %72 = vector.shape_cast %71 : vector<8xf32> to vector<8x1xf32>
    %73 = vector.broadcast %72 : vector<8x1xf32> to vector<8x8xf32>
    %74 = arith.subf %70, %73 : vector<8x8xf32>
    %75 = math.exp %74 : vector<8x8xf32>
    %cst_20 = arith.constant dense<0.000000e+00> : vector<8xf32>
    %76 = vector.multi_reduction <add>, %75, %cst_20 [1] : vector<8x8xf32> to vector<8xf32>
    %77 = vector.shape_cast %76 : vector<8xf32> to vector<8x1xf32>
    %78 = vector.broadcast %77 : vector<8x1xf32> to vector<8x8xf32>
    %79 = arith.divf %75, %78 : vector<8x8xf32>
    %cst_21 = arith.constant dense<0.000000e+00> : vector<8x8xf32>
    %80 = tpu.matmul %79, %69, %cst_21 {dimension_numbers = #tpu.dot_dimension_numbers<[1], [0], [0], [1], [0, 0, 1, 1], [], []>} : vector<8x8xf32>, vector<8x8xf32>, vector<8x8xf32> -> vector<8x8xf32>
    %81 = vector.extract_strided_slice %38 {offsets = [0, 24], sizes = [8, 8], strides = [1, 1]} : vector<16x96xf32> to vector<8x8xf32>
    %82 = vector.extract_strided_slice %38 {offsets = [0, 56], sizes = [8, 8], strides = [1, 1]} : vector<16x96xf32> to vector<8x8xf32>
    %83 = vector.extract_strided_slice %38 {offsets = [0, 88], sizes = [8, 8], strides = [1, 1]} : vector<16x96xf32> to vector<8x8xf32>
    %cst_22 = arith.constant dense<0.000000e+00> : vector<8x8xf32>
    %84 = tpu.matmul %81, %82, %cst_22 {dimension_numbers = #tpu.dot_dimension_numbers<[1], [1], [0], [0], [0, 0, 1, 0], [], []>} : vector<8x8xf32>, vector<8x8xf32>, vector<8x8xf32> -> vector<8x8xf32>
    %cst_23 = arith.constant dense<0xFF800000> : vector<8xf32>
    %85 = vector.multi_reduction <maximumf>, %84, %cst_23 [1] : vector<8x8xf32> to vector<8xf32>
    %86 = vector.shape_cast %85 : vector<8xf32> to vector<8x1xf32>
    %87 = vector.broadcast %86 : vector<8x1xf32> to vector<8x8xf32>
    %88 = arith.subf %84, %87 : vector<8x8xf32>
    %89 = math.exp %88 : vector<8x8xf32>
    %cst_24 = arith.constant dense<0.000000e+00> : vector<8xf32>
    %90 = vector.multi_reduction <add>, %89, %cst_24 [1] : vector<8x8xf32> to vector<8xf32>
    %91 = vector.shape_cast %90 : vector<8xf32> to vector<8x1xf32>
    %92 = vector.broadcast %91 : vector<8x1xf32> to vector<8x8xf32>
    %93 = arith.divf %89, %92 : vector<8x8xf32>
    %cst_25 = arith.constant dense<0.000000e+00> : vector<8x8xf32>
    %94 = tpu.matmul %93, %83, %cst_25 {dimension_numbers = #tpu.dot_dimension_numbers<[1], [0], [0], [1], [0, 0, 1, 1], [], []>} : vector<8x8xf32>, vector<8x8xf32>, vector<8x8xf32> -> vector<8x8xf32>
    %95 = tpu.concatenate %52, %66, %80, %94 in 1 : vector<8x8xf32>, vector<8x8xf32>, vector<8x8xf32>, vector<8x8xf32> -> vector<8x32xf32>
    %96 = vector.extract_strided_slice %38 {offsets = [8, 0], sizes = [8, 8], strides = [1, 1]} : vector<16x96xf32> to vector<8x8xf32>
    %97 = vector.extract_strided_slice %38 {offsets = [8, 32], sizes = [8, 8], strides = [1, 1]} : vector<16x96xf32> to vector<8x8xf32>
    %98 = vector.extract_strided_slice %38 {offsets = [8, 64], sizes = [8, 8], strides = [1, 1]} : vector<16x96xf32> to vector<8x8xf32>
    %cst_26 = arith.constant dense<0.000000e+00> : vector<8x8xf32>
    %99 = tpu.matmul %96, %97, %cst_26 {dimension_numbers = #tpu.dot_dimension_numbers<[1], [1], [0], [0], [0, 0, 1, 0], [], []>} : vector<8x8xf32>, vector<8x8xf32>, vector<8x8xf32> -> vector<8x8xf32>
    %cst_27 = arith.constant dense<0xFF800000> : vector<8xf32>
    %100 = vector.multi_reduction <maximumf>, %99, %cst_27 [1] : vector<8x8xf32> to vector<8xf32>
    %101 = vector.shape_cast %100 : vector<8xf32> to vector<8x1xf32>
    %102 = vector.broadcast %101 : vector<8x1xf32> to vector<8x8xf32>
    %103 = arith.subf %99, %102 : vector<8x8xf32>
    %104 = math.exp %103 : vector<8x8xf32>
    %cst_28 = arith.constant dense<0.000000e+00> : vector<8xf32>
    %105 = vector.multi_reduction <add>, %104, %cst_28 [1] : vector<8x8xf32> to vector<8xf32>
    %106 = vector.shape_cast %105 : vector<8xf32> to vector<8x1xf32>
    %107 = vector.broadcast %106 : vector<8x1xf32> to vector<8x8xf32>
    %108 = arith.divf %104, %107 : vector<8x8xf32>
    %cst_29 = arith.constant dense<0.000000e+00> : vector<8x8xf32>
    %109 = tpu.matmul %108, %98, %cst_29 {dimension_numbers = #tpu.dot_dimension_numbers<[1], [0], [0], [1], [0, 0, 1, 1], [], []>} : vector<8x8xf32>, vector<8x8xf32>, vector<8x8xf32> -> vector<8x8xf32>
    %110 = vector.extract_strided_slice %38 {offsets = [8, 8], sizes = [8, 8], strides = [1, 1]} : vector<16x96xf32> to vector<8x8xf32>
    %111 = vector.extract_strided_slice %38 {offsets = [8, 40], sizes = [8, 8], strides = [1, 1]} : vector<16x96xf32> to vector<8x8xf32>
    %112 = vector.extract_strided_slice %38 {offsets = [8, 72], sizes = [8, 8], strides = [1, 1]} : vector<16x96xf32> to vector<8x8xf32>
    %cst_30 = arith.constant dense<0.000000e+00> : vector<8x8xf32>
    %113 = tpu.matmul %110, %111, %cst_30 {dimension_numbers = #tpu.dot_dimension_numbers<[1], [1], [0], [0], [0, 0, 1, 0], [], []>} : vector<8x8xf32>, vector<8x8xf32>, vector<8x8xf32> -> vector<8x8xf32>
    %cst_31 = arith.constant dense<0xFF800000> : vector<8xf32>
    %114 = vector.multi_reduction <maximumf>, %113, %cst_31 [1] : vector<8x8xf32> to vector<8xf32>
    %115 = vector.shape_cast %114 : vector<8xf32> to vector<8x1xf32>
    %116 = vector.broadcast %115 : vector<8x1xf32> to vector<8x8xf32>
    %117 = arith.subf %113, %116 : vector<8x8xf32>
    %118 = math.exp %117 : vector<8x8xf32>
    %cst_32 = arith.constant dense<0.000000e+00> : vector<8xf32>
    %119 = vector.multi_reduction <add>, %118, %cst_32 [1] : vector<8x8xf32> to vector<8xf32>
    %120 = vector.shape_cast %119 : vector<8xf32> to vector<8x1xf32>
    %121 = vector.broadcast %120 : vector<8x1xf32> to vector<8x8xf32>
    %122 = arith.divf %118, %121 : vector<8x8xf32>
    %cst_33 = arith.constant dense<0.000000e+00> : vector<8x8xf32>
    %123 = tpu.matmul %122, %112, %cst_33 {dimension_numbers = #tpu.dot_dimension_numbers<[1], [0], [0], [1], [0, 0, 1, 1], [], []>} : vector<8x8xf32>, vector<8x8xf32>, vector<8x8xf32> -> vector<8x8xf32>
    %124 = vector.extract_strided_slice %38 {offsets = [8, 16], sizes = [8, 8], strides = [1, 1]} : vector<16x96xf32> to vector<8x8xf32>
    %125 = vector.extract_strided_slice %38 {offsets = [8, 48], sizes = [8, 8], strides = [1, 1]} : vector<16x96xf32> to vector<8x8xf32>
    %126 = vector.extract_strided_slice %38 {offsets = [8, 80], sizes = [8, 8], strides = [1, 1]} : vector<16x96xf32> to vector<8x8xf32>
    %cst_34 = arith.constant dense<0.000000e+00> : vector<8x8xf32>
    %127 = tpu.matmul %124, %125, %cst_34 {dimension_numbers = #tpu.dot_dimension_numbers<[1], [1], [0], [0], [0, 0, 1, 0], [], []>} : vector<8x8xf32>, vector<8x8xf32>, vector<8x8xf32> -> vector<8x8xf32>
    %cst_35 = arith.constant dense<0xFF800000> : vector<8xf32>
    %128 = vector.multi_reduction <maximumf>, %127, %cst_35 [1] : vector<8x8xf32> to vector<8xf32>
    %129 = vector.shape_cast %128 : vector<8xf32> to vector<8x1xf32>
    %130 = vector.broadcast %129 : vector<8x1xf32> to vector<8x8xf32>
    %131 = arith.subf %127, %130 : vector<8x8xf32>
    %132 = math.exp %131 : vector<8x8xf32>
    %cst_36 = arith.constant dense<0.000000e+00> : vector<8xf32>
    %133 = vector.multi_reduction <add>, %132, %cst_36 [1] : vector<8x8xf32> to vector<8xf32>
    %134 = vector.shape_cast %133 : vector<8xf32> to vector<8x1xf32>
    %135 = vector.broadcast %134 : vector<8x1xf32> to vector<8x8xf32>
    %136 = arith.divf %132, %135 : vector<8x8xf32>
    %cst_37 = arith.constant dense<0.000000e+00> : vector<8x8xf32>
    %137 = tpu.matmul %136, %126, %cst_37 {dimension_numbers = #tpu.dot_dimension_numbers<[1], [0], [0], [1], [0, 0, 1, 1], [], []>} : vector<8x8xf32>, vector<8x8xf32>, vector<8x8xf32> -> vector<8x8xf32>
    %138 = vector.extract_strided_slice %38 {offsets = [8, 24], sizes = [8, 8], strides = [1, 1]} : vector<16x96xf32> to vector<8x8xf32>
    %139 = vector.extract_strided_slice %38 {offsets = [8, 56], sizes = [8, 8], strides = [1, 1]} : vector<16x96xf32> to vector<8x8xf32>
    %140 = vector.extract_strided_slice %38 {offsets = [8, 88], sizes = [8, 8], strides = [1, 1]} : vector<16x96xf32> to vector<8x8xf32>
    %cst_38 = arith.constant dense<0.000000e+00> : vector<8x8xf32>
    %141 = tpu.matmul %138, %139, %cst_38 {dimension_numbers = #tpu.dot_dimension_numbers<[1], [1], [0], [0], [0, 0, 1, 0], [], []>} : vector<8x8xf32>, vector<8x8xf32>, vector<8x8xf32> -> vector<8x8xf32>
    %cst_39 = arith.constant dense<0xFF800000> : vector<8xf32>
    %142 = vector.multi_reduction <maximumf>, %141, %cst_39 [1] : vector<8x8xf32> to vector<8xf32>
    %143 = vector.shape_cast %142 : vector<8xf32> to vector<8x1xf32>
    %144 = vector.broadcast %143 : vector<8x1xf32> to vector<8x8xf32>
    %145 = arith.subf %141, %144 : vector<8x8xf32>
    %146 = math.exp %145 : vector<8x8xf32>
    %cst_40 = arith.constant dense<0.000000e+00> : vector<8xf32>
    %147 = vector.multi_reduction <add>, %146, %cst_40 [1] : vector<8x8xf32> to vector<8xf32>
    %148 = vector.shape_cast %147 : vector<8xf32> to vector<8x1xf32>
    %149 = vector.broadcast %148 : vector<8x1xf32> to vector<8x8xf32>
    %150 = arith.divf %146, %149 : vector<8x8xf32>
    %cst_41 = arith.constant dense<0.000000e+00> : vector<8x8xf32>
    %151 = tpu.matmul %150, %140, %cst_41 {dimension_numbers = #tpu.dot_dimension_numbers<[1], [0], [0], [1], [0, 0, 1, 1], [], []>} : vector<8x8xf32>, vector<8x8xf32>, vector<8x8xf32> -> vector<8x8xf32>
    %152 = tpu.concatenate %109, %123, %137, %151 in 1 : vector<8x8xf32>, vector<8x8xf32>, vector<8x8xf32>, vector<8x8xf32> -> vector<8x32xf32>
    %153 = tpu.concatenate %95, %152 in 0 : vector<8x32xf32>, vector<8x32xf32> -> vector<16x32xf32>
    %cst_42 = arith.constant dense<0.000000e+00> : vector<16x32xf32>
    %154 = tpu.matmul %153, %12, %cst_42 {dimension_numbers = #tpu.dot_dimension_numbers<[1], [0], [0], [1], [0, 0, 1, 1], [], []>} : vector<16x32xf32>, vector<32x32xf32>, vector<16x32xf32> -> vector<16x32xf32>
    %155 = vector.broadcast %6 : vector<1x32xf32> to vector<16x32xf32>
    %156 = arith.addf %154, %155 : vector<16x32xf32>
    %157 = arith.addf %156, %0 : vector<16x32xf32>
    %cst_43 = arith.constant dense<0.000000e+00> : vector<16xf32>
    %158 = vector.multi_reduction <add>, %157, %cst_43 [1] : vector<16x32xf32> to vector<16xf32>
    %159 = vector.shape_cast %158 : vector<16xf32> to vector<16x1xf32>
    %cst_44 = arith.constant 3.200000e+01 : f32
    %160 = vector.broadcast %cst_44 : f32 to vector<16x1xf32>
    %161 = arith.divf %159, %160 : vector<16x1xf32>
    %162 = vector.broadcast %161 : vector<16x1xf32> to vector<16x32xf32>
    %163 = arith.subf %157, %162 : vector<16x32xf32>
    %164 = arith.mulf %163, %163 : vector<16x32xf32>
    %cst_45 = arith.constant dense<0.000000e+00> : vector<16xf32>
    %165 = vector.multi_reduction <add>, %164, %cst_45 [1] : vector<16x32xf32> to vector<16xf32>
    %166 = vector.shape_cast %165 : vector<16xf32> to vector<16x1xf32>
    %cst_46 = arith.constant 3.200000e+01 : f32
    %167 = vector.broadcast %cst_46 : f32 to vector<16x1xf32>
    %168 = arith.divf %166, %167 : vector<16x1xf32>
    %169 = vector.broadcast %161 : vector<16x1xf32> to vector<16x32xf32>
    %170 = arith.subf %157, %169 : vector<16x32xf32>
    %cst_47 = arith.constant 9.99999974E-6 : f32
    %171 = vector.broadcast %cst_47 : f32 to vector<16x1xf32>
    %172 = arith.addf %168, %171 : vector<16x1xf32>
    %173 = math.rsqrt %172 : vector<16x1xf32>
    %174 = vector.broadcast %173 : vector<16x1xf32> to vector<16x32xf32>
    %175 = arith.mulf %170, %174 : vector<16x32xf32>
    %176 = vector.broadcast %7 : vector<1x32xf32> to vector<16x32xf32>
    %177 = arith.mulf %175, %176 : vector<16x32xf32>
    %178 = vector.broadcast %8 : vector<1x32xf32> to vector<16x32xf32>
    %179 = arith.addf %177, %178 : vector<16x32xf32>
    %cst_48 = arith.constant dense<0.000000e+00> : vector<16x128xf32>
    %180 = tpu.matmul %179, %13, %cst_48 {dimension_numbers = #tpu.dot_dimension_numbers<[1], [0], [0], [1], [0, 0, 1, 1], [], []>} : vector<16x32xf32>, vector<32x128xf32>, vector<16x128xf32> -> vector<16x128xf32>
    %181 = vector.broadcast %9 : vector<1x128xf32> to vector<16x128xf32>
    %182 = arith.addf %180, %181 : vector<16x128xf32>
    %cst_49 = arith.constant 5.000000e-01 : f32
    %183 = vector.broadcast %cst_49 : f32 to vector<16x128xf32>
    %184 = arith.mulf %183, %182 : vector<16x128xf32>
    %cst_50 = arith.constant 0.707106769 : f32
    %185 = vector.broadcast %cst_50 : f32 to vector<16x128xf32>
    %186 = arith.mulf %182, %185 : vector<16x128xf32>
    %187 = math.erf %186 : vector<16x128xf32>
    %cst_51 = arith.constant 1.000000e+00 : f32
    %188 = vector.broadcast %cst_51 : f32 to vector<16x128xf32>
    %189 = arith.addf %188, %187 : vector<16x128xf32>
    %190 = arith.mulf %184, %189 : vector<16x128xf32>
    %c0_52 = arith.constant 0 : index
    %c0_53 = arith.constant 0 : index
    %191 = vector.load %arg3[%c0_52, %c0_53] : memref<128x32xf32, #tpu.memory_space<vmem>>, vector<128x32xf32>
    %cst_54 = arith.constant dense<0.000000e+00> : vector<16x32xf32>
    %192 = tpu.matmul %190, %191, %cst_54 {dimension_numbers = #tpu.dot_dimension_numbers<[1], [0], [0], [1], [0, 0, 1, 1], [], []>} : vector<16x128xf32>, vector<128x32xf32>, vector<16x32xf32> -> vector<16x32xf32>
    %193 = vector.broadcast %10 : vector<1x32xf32> to vector<16x32xf32>
    %194 = arith.addf %192, %193 : vector<16x32xf32>
    %195 = arith.addf %194, %157 : vector<16x32xf32>
    %c0_55 = arith.constant 0 : index
    %c0_56 = arith.constant 0 : index
    %196 = vector.load %arg5[%c0_55, %c0_56] : memref<16x32xf32, #tpu.memory_space<vmem>>, vector<16x32xf32>
    tpu.vector_store %arg5[%c0_55, %c0_56], %195 {strides = array<i32>} : memref<16x32xf32, #tpu.memory_space<vmem>>, vector<16x32xf32>,
    return
  }
  func.func @transform_0(%arg0: i32) -> (i32, i32) {
    %c0_i32 = arith.constant 0 : i32
    %c0_i32_0 = arith.constant 0 : i32
    %c0_i32_1 = arith.constant 0 : i32
    return %c0_i32, %c0_i32_0 : i32, i32
  }
  func.func @transform_1(%arg0: i32) -> (i32, i32) {
    %c0_i32 = arith.constant 0 : i32
    %c0_i32_0 = arith.constant 0 : i32
    %c0_i32_1 = arith.constant 0 : i32
    return %c0_i32, %c0_i32_0 : i32, i32
  }
  func.func @transform_2(%arg0: i32) -> (i32, i32) {
    %c0_i32 = arith.constant 0 : i32
    %c0_i32_0 = arith.constant 0 : i32
    %c0_i32_1 = arith.constant 0 : i32
    return %c0_i32, %c0_i32_0 : i32, i32
  }
  func.func @transform_3(%arg0: i32) -> (i32, i32) {
    %c0_i32 = arith.constant 0 : i32
    %c0_i32_0 = arith.constant 0 : i32
    %c0_i32_1 = arith.constant 0 : i32
    return %c0_i32, %c0_i32_0 : i32, i32
  }
  func.func @transform_4(%arg0: i32) -> (i32, i32) {
    %c0_i32 = arith.constant 0 : i32
    %c0_i32_0 = arith.constant 0 : i32
    %c0_i32_1 = arith.constant 0 : i32
    return %c0_i32, %c0_i32_0 : i32, i32
  }
}

</mosaic_0001>

<llo_original>
// kernel: tpu_custom_call.1
$region0: #{tpu_custom_call.1}
  #allocation0 [shape = 'u32[]', space=smem, size = 0x4, offset = 0x4, fixed_abs, tag = 'smem constant byte address 0x4 - core index']
  #allocation1 [shape = 'u32[144,128]{1,0:T(1,128)}', space=vmem, size = 0x12000, scoped, tag = 'internal scratch']
  %s0 = inlined_call_operand.vmem [shape: f32[16,32], index: 0, kind: input, shape index: {}]
  %s1 = inlined_call_operand.vmem [shape: f32[32,256], index: 1, kind: input, shape index: {}]
  %s2 = inlined_call_operand.vmem [shape: f32[128,32], index: 2, kind: input, shape index: {}]
  %s3 = inlined_call_operand.vmem [shape: f32[8,128], index: 3, kind: input, shape index: {}]
  %s4 = inlined_call_operand.hbm [shape: f32[16,32], index: 4, kind: output, shape index: {}]
  %s5 = sld [smem:[#allocation0]]
  $region26: #{tpu_custom_call.1} parent=0
    _
  %s7 = ssub.s32 1, %s5
  %s8 = scalar_select 0, %s7, %s5
  $region1: #{tpu_custom_call.1} parent=0
    #allocation2 [shape = 'u8[8192]{0}', space=vmem, size = 0x2000, scoped, tag = 'output window, operand 0, single buffered']
    #allocation3 [shape = 's32[1]{0}', space=sflag, size = 0x4, scoped, tag = 'scoped memory for tpu_custom_call.1']
    %9 = vsyncpa [#allocation3], 0
    // Predicated region
    $region2: #{tpu_custom_call.1} parent=1 // pred_check
      _
    $region3: #{tpu_custom_call.1} parent=1 // pred_check_branch
      %11 = sbr.rel (0) target = $region5
    $region4: #{tpu_custom_call.1} parent=1 // pred_region
      _
    $region5: #{tpu_custom_call.1} parent=1 // pred_fallthru
      _
    // Predicated region
    $region6: #{tpu_custom_call.1} parent=1 // pred_check
      _
    $region7: #{tpu_custom_call.1} parent=1 // pred_check_branch
      %13 = sbr.rel (0) target = $region9
    $region8: #{tpu_custom_call.1} parent=1 // pred_region
      _
    $region9: #{tpu_custom_call.1} parent=1 // pred_fallthru
      _
    // Predicated region
    $region10: #{tpu_custom_call.1} parent=1 // pred_check
      _
    $region11: #{tpu_custom_call.1} parent=1 // pred_check_branch
      %15 = sbr.rel (0) target = $region13
    $region12: #{tpu_custom_call.1} parent=1 // pred_region
      _
    $region13: #{tpu_custom_call.1} parent=1 // pred_fallthru
      _
    // Predicated region
    $region14: #{tpu_custom_call.1} parent=1 // pred_check
      _
    $region15: #{tpu_custom_call.1} parent=1 // pred_check_branch
      %17 = sbr.rel (0) target = $region17
    $region16: #{tpu_custom_call.1} parent=1 // pred_region
      _
    $region17: #{tpu_custom_call.1} parent=1 // pred_fallthru
      _
    %v18 = vld [vmem:[%s0] sm:$0xff]
    %v19 = vld [vmem:[%s0 + $0x8] sm:$0xff]
    %v20 = vld [vmem:[%s1] sm:$0xff]
    %v21 = vld [vmem:[%s1 + $0x8] sm:$0xff]
    %v22 = vld [vmem:[%s1 + $0x10] sm:$0xff]
    %v23 = vld [vmem:[%s1 + $0x18] sm:$0xff]
    %v24 = vld [vmem:[%s1 + $0x20] sm:$0xff]
    %v25 = vld [vmem:[%s1 + $0x28] sm:$0xff]
    %v26 = vld [vmem:[%s1 + $0x30] sm:$0xff]
    %v27 = vld [vmem:[%s1 + $0x38] sm:$0xff]
    %v28 = vld [vmem:[%s3] sm:$0xff]
    %vm29 = vcmask 261120
    %v30 = vsel %vm29, %v18, 0.0
    %31 = vadd.xlane.f32.xlu0 %v30
    %v32 = vpop.xlane.xlu0 %31
    %v33 = vsel %vm29, %v19, 0.0
    %34 = vadd.xlane.f32.xlu0 %v33
    %v35 = vpop.xlane.xlu0 %34
    %v36 = vrcp.pop 32.0
    %v37 = vmul.f32 %v32, %v36
    %v38 = vmul.f32 %v35, %v36
    %v39 = vsub.f32 %v18, %v37
    %v40 = vsub.f32 %v19, %v38
    %v41 = vmul.f32 %v39, %v39
    %v42 = vmul.f32 %v40, %v40
    %v43 = vsel %vm29, %v41, 0.0
    %44 = vadd.xlane.f32.xlu0 %v43
    %v45 = vpop.xlane.xlu0 %44
    %v46 = vsel %vm29, %v42, 0.0
    %47 = vadd.xlane.f32.xlu0 %v46
    %v48 = vpop.xlane.xlu0 %47
    %v49 = vmul.f32 %v45, %v36
    %v50 = vmul.f32 %v48, %v36
    %v51 = vadd.f32 %v49, 1e-05
    %v52 = vadd.f32 %v50, 1e-05
    %v53 = vrsqrt.pop %v51
    %v54 = vrsqrt.pop %v52
    %v55 = vmul.f32 %v39, %v53
    %v56 = vmul.f32 %v40, %v54
    %v57 = vlaneseq
    %v58 = vshrl.u32 %v57, 7
    %v59 = vsub.s32 0, %v58
    %v60 = vrot.slane %v28, %v59
    %v61 = vmul.f32 %v55, %v60
    %v62 = vmul.f32 %v56, %v60
    %v63 = vlaneseq
    %v64 = vshrl.u32 %v63, 7
    %v65 = vsub.s32 1, %v64
    %v66 = vrot.slane %v28, %v65
    %v67 = vadd.f32 %v61, %v66
    %v68 = vadd.f32 %v62, %v66
    %v69 = vlaneseq
    %v70 = vshrl.u32 %v69, 7
    %v71 = vsub.s32 2, %v70
    %v72 = vrot.slane %v28, %v71
    %v74 = vsel %vm29, %v67, 0
    %v77 = vsel %vm29, %v68, 0
    %79 = vmatprep.subr.mxu0 0.0
    %80 = vmatpush1.msra.mxu0 %v20
    %81 = vmatprep.subr.mxu0 0.0
    %82 = vmatpush1.msra.mxu0 %v22
    %83 = vmatprep.subr.mxu0 0.0
    %84 = vmatpush1.msra.mxu0 %v24
    %85 = vmatprep.subr.mxu0 0.0
    %86 = vmatpush1.msra.mxu0 %v26
    %87 = vmatprep.subr.mxu0 0.0
    %88 = vmatpush1.msra.mxu0 0.0
    %89 = vmatprep.subr.mxu0 0.0
    %90 = vmatpush1.msra.mxu0 0.0
    %91 = vmatprep.subr.mxu0 0.0
    %92 = vmatpush1.msra.mxu0 0.0
    %93 = vmatprep.subr.mxu0 0.0
    %94 = vmatpush1.msra.mxu0 0.0
    %95 = vmatprep.subr.mxu0 0.0
    %96 = vmatpush1.msra.mxu0 0.0
    %97 = vmatprep.subr.mxu0 0.0
    %98 = vmatpush1.msra.mxu0 0.0
    %99 = vmatprep.subr.mxu0 0.0
    %100 = vmatpush1.msra.mxu0 0.0
    %101 = vmatprep.subr.mxu0 0.0
    %102 = vmatpush1.msra.mxu0 0.0
    %103 = vmatprep.subr.mxu0 0.0
    %104 = vmatpush1.msra.mxu0 0.0
    %105 = vmatprep.subr.mxu0 0.0
    %106 = vmatpush1.msra.mxu0 0.0
    %107 = vmatprep.subr.mxu0 0.0
    %108 = vmatpush1.msra.mxu0 0.0
    %109 = vmatprep.subr.mxu0 0.0
    %110 = vmatpush1.msra.mxu0 0.0
    %111 = vmatprep.subr.mxu0 0.0
    %112 = vmatpush1.msra.mxu0 0.0
    %113 = vmatprep.subr.mxu0 0.0
    %114 = vmatpush1.msra.mxu0 0.0
    %115 = vmatprep.subr.mxu0 0.0
    %116 = vmatpush1.msra.mxu0 0.0
    %117 = vmatprep.subr.mxu0 0.0
    %118 = vmatpush1.msra.mxu0 0.0
    %119 = vmatprep.subr.mxu0 0.0
    %120 = vmatpush1.msra.mxu0 0.0
    %121 = vmatprep.subr.mxu0 0.0
    %122 = vmatpush1.msra.mxu0 0.0
    %123 = vmatprep.subr.mxu0 0.0
    %124 = vmatpush1.msra.mxu0 0.0
    %125 = vmatprep.subr.mxu0 0.0
    %126 = vmatpush1.msra.mxu0 0.0
    %127 = vmatprep.subr.mxu0 0.0
    %128 = vmatpush1.msra.mxu0 0.0
    %129 = vmatprep.subr.mxu0 0.0
    %130 = vmatpush1.msra.mxu0 0.0
    %131 = vmatprep.subr.mxu0 0.0
    %132 = vmatpush1.msra.mxu0 0.0
    %133 = vmatprep.subr.mxu0 0.0
    %134 = vmatpush1.msra.mxu0 0.0
    %135 = vmatprep.subr.mxu0 0.0
    %136 = vmatpush1.msra.mxu0 0.0
    %137 = vmatprep.subr.mxu0 0.0
    %138 = vmatpush1.msra.mxu0 0.0
    %139 = vmatprep.subr.mxu0 0.0
    %140 = vmatpush1.msra.mxu0 0.0
    %141 = vmatprep.subr.mxu0 0.0
    %142 = vmatpush1.msra.mxu0 0.0
    %143 = vmatprep.mubr.f32.mxu0 0.0
    %144 = vmatmul.mubr.f32.gmra.mrb[0].mxu0 %v74
    %v145 = vpop.f32.mrb[0].mxu0
    %v146 = vadd.f32 %v72, %v145
    %v147 = vpop.f32.mrb[0].mxu0
    %148 = vmatprep.mubr.f32.mxu0 0.0
    %149 = vmatmul.mubr.f32.gmra.mrb[0].mxu0 %v77
    %v150 = vpop.f32.mrb[0].mxu0
    %v151 = vadd.f32 %v72, %v150
    %v152 = vpop.f32.mrb[0].mxu0
    %153 = vdwg.mxu0
    %155 = vrot.lane.b32.xlu0 %v146, 96
    %v156 = vpop.permute.xlu0 %155
    %vm157 = vcmask 64512
    %v158 = vsel %vm157, %v146, 0
    %v160 = vsel %vm157, %v156, 0
    %162 = vmatprep.subr.mxu0 0.0
    %163 = vmatpush1.xpose.msra.mxu0 %v160
    %164 = vmatprep.subr.mxu0 0.0
    %165 = vmatpush1.xpose.msra.mxu0 0.0
    %166 = vmatprep.subr.mxu0 0.0
    %167 = vmatpush1.xpose.msra.mxu0 0.0
    %168 = vmatprep.subr.mxu0 0.0
    %169 = vmatpush1.xpose.msra.mxu0 0.0
    %170 = vmatprep.subr.mxu0 0.0
    %171 = vmatpush1.xpose.msra.mxu0 0.0
    %172 = vmatprep.subr.mxu0 0.0
    %173 = vmatpush1.xpose.msra.mxu0 0.0
    %174 = vmatprep.subr.mxu0 0.0
    %175 = vmatpush1.xpose.msra.mxu0 0.0
    %176 = vmatprep.subr.mxu0 0.0
    %177 = vmatpush1.xpose.msra.mxu0 0.0
    %178 = vmatprep.subr.mxu0 0.0
    %179 = vmatpush1.xpose.msra.mxu0 0.0
    %180 = vmatprep.subr.mxu0 0.0
    %181 = vmatpush1.xpose.msra.mxu0 0.0
    %182 = vmatprep.subr.mxu0 0.0
    %183 = vmatpush1.xpose.msra.mxu0 0.0
    %184 = vmatprep.subr.mxu0 0.0
    %185 = vmatpush1.xpose.msra.mxu0 0.0
    %186 = vmatprep.subr.mxu0 0.0
    %187 = vmatpush1.xpose.msra.mxu0 0.0
    %188 = vmatprep.subr.mxu0 0.0
    %189 = vmatpush1.xpose.msra.mxu0 0.0
    %190 = vmatprep.subr.mxu0 0.0
    %191 = vmatpush1.xpose.msra.mxu0 0.0
    %192 = vmatprep.subr.mxu0 0.0
    %193 = vmatpush1.xpose.msra.mxu0 0.0
    %194 = vmatprep.subr.mxu0 0.0
    %195 = vmatpush1.xpose.msra.mxu0 0.0
    %196 = vmatprep.subr.mxu0 0.0
    %197 = vmatpush1.xpose.msra.mxu0 0.0
    %198 = vmatprep.subr.mxu0 0.0
    %199 = vmatpush1.xpose.msra.mxu0 0.0
    %200 = vmatprep.subr.mxu0 0.0
    %201 = vmatpush1.xpose.msra.mxu0 0.0
    %202 = vmatprep.subr.mxu0 0.0
    %203 = vmatpush1.xpose.msra.mxu0 0.0
    %204 = vmatprep.subr.mxu0 0.0
    %205 = vmatpush1.xpose.msra.mxu0 0.0
    %206 = vmatprep.subr.mxu0 0.0
    %207 = vmatpush1.xpose.msra.mxu0 0.0
    %208 = vmatprep.subr.mxu0 0.0
    %209 = vmatpush1.xpose.msra.mxu0 0.0
    %210 = vmatprep.subr.mxu0 0.0
    %211 = vmatpush1.xpose.msra.mxu0 0.0
    %212 = vmatprep.subr.mxu0 0.0
    %213 = vmatpush1.xpose.msra.mxu0 0.0
    %214 = vmatprep.subr.mxu0 0.0
    %215 = vmatpush1.xpose.msra.mxu0 0.0
    %216 = vmatprep.subr.mxu0 0.0
    %217 = vmatpush1.xpose.msra.mxu0 0.0
    %218 = vmatprep.subr.mxu0 0.0
    %219 = vmatpush1.xpose.msra.mxu0 0.0
    %220 = vmatprep.subr.mxu0 0.0
    %221 = vmatpush1.xpose.msra.mxu0 0.0
    %222 = vmatprep.subr.mxu0 0.0
    %223 = vmatpush1.xpose.msra.mxu0 0.0
    %224 = vmatprep.subr.mxu0 0.0
    %225 = vmatpush1.xpose.msra.mxu0 0.0
    %226 = vmatprep.mubr.f32.mxu0 0.0
    %227 = vmatmul.mubr.f32.gmra.mrb[0].mxu0 %v158
    %v228 = vpop.f32.mrb[0].mxu0
    %v229 = vadd.f32 0.0, %v228
    %v230 = vpop.f32.mrb[0].mxu0
    %231 = vdwg.mxu0
    %v232 = vsel %vm157, %v229, -inf
    %233 = vmax.xlane.f32.xlu0 %v232
    %v234 = vpop.xlane.xlu0 %233
    %v235 = vsub.f32 %v229, %v234
    %v236 = vmul.f32 %v235, 1.442695
    %v237 = vpow.pop %v236
    %v238 = vsel %vm157, %v237, 0.0
    %239 = vadd.xlane.f32.xlu0 %v238
    %v240 = vpop.xlane.xlu0 %239
    %v241 = vrcp.pop %v240
    %v242 = vmul.f32 %v237, %v241
    %243 = vrot.lane.b32.xlu0 %v146, 64
    %v244 = vpop.permute.xlu0 %243
    %v247 = vsel %vm157, %v242, 0
    %249 = vmatprep.subr.mxu0 0.0
    %250 = vmatpush1.msra.mxu0 %v244
    %251 = vmatprep.subr.mxu0 0.0
    %252 = vmatpush1.msra.mxu0 0.0
    %253 = vmatprep.subr.mxu0 0.0
    %254 = vmatpush1.msra.mxu0 0.0
    %255 = vmatprep.subr.mxu0 0.0
    %256 = vmatpush1.msra.mxu0 0.0
    %257 = vmatprep.subr.mxu0 0.0
    %258 = vmatpush1.msra.mxu0 0.0
    %259 = vmatprep.subr.mxu0 0.0
    %260 = vmatpush1.msra.mxu0 0.0
    %261 = vmatprep.subr.mxu0 0.0
    %262 = vmatpush1.msra.mxu0 0.0
    %263 = vmatprep.subr.mxu0 0.0
    %264 = vmatpush1.msra.mxu0 0.0
    %265 = vmatprep.subr.mxu0 0.0
    %266 = vmatpush1.msra.mxu0 0.0
    %267 = vmatprep.subr.mxu0 0.0
    %268 = vmatpush1.msra.mxu0 0.0
    %269 = vmatprep.subr.mxu0 0.0
    %270 = vmatpush1.msra.mxu0 0.0
    %271 = vmatprep.subr.mxu0 0.0
    %272 = vmatpush1.msra.mxu0 0.0
    %273 = vmatprep.subr.mxu0 0.0
    %274 = vmatpush1.msra.mxu0 0.0
    %275 = vmatprep.subr.mxu0 0.0
    %276 = vmatpush1.msra.mxu0 0.0
    %277 = vmatprep.subr.mxu0 0.0
    %278 = vmatpush1.msra.mxu0 0.0
    %279 = vmatprep.subr.mxu0 0.0
    %280 = vmatpush1.msra.mxu0 0.0
    %281 = vmatprep.subr.mxu0 0.0
    %282 = vmatpush1.msra.mxu0 0.0
    %283 = vmatprep.subr.mxu0 0.0
    %284 = vmatpush1.msra.mxu0 0.0
    %285 = vmatprep.subr.mxu0 0.0
    %286 = vmatpush1.msra.mxu0 0.0
    %287 = vmatprep.subr.mxu0 0.0
    %288 = vmatpush1.msra.mxu0 0.0
    %289 = vmatprep.subr.mxu0 0.0
    %290 = vmatpush1.msra.mxu0 0.0
    %291 = vmatprep.subr.mxu0 0.0
    %292 = vmatpush1.msra.mxu0 0.0
    %293 = vmatprep.subr.mxu0 0.0
    %294 = vmatpush1.msra.mxu0 0.0
    %295 = vmatprep.subr.mxu0 0.0
    %296 = vmatpush1.msra.mxu0 0.0
    %297 = vmatprep.subr.mxu0 0.0
    %298 = vmatpush1.msra.mxu0 0.0
    %299 = vmatprep.subr.mxu0 0.0
    %300 = vmatpush1.msra.mxu0 0.0
    %301 = vmatprep.subr.mxu0 0.0
    %302 = vmatpush1.msra.mxu0 0.0
    %303 = vmatprep.subr.mxu0 0.0
    %304 = vmatpush1.msra.mxu0 0.0
    %305 = vmatprep.subr.mxu0 0.0
    %306 = vmatpush1.msra.mxu0 0.0
    %307 = vmatprep.subr.mxu0 0.0
    %308 = vmatpush1.msra.mxu0 0.0
    %309 = vmatprep.subr.mxu0 0.0
    %310 = vmatpush1.msra.mxu0 0.0
    %311 = vmatprep.subr.mxu0 0.0
    %312 = vmatpush1.msra.mxu0 0.0
    %313 = vmatprep.mubr.f32.mxu0 0.0
    %314 = vmatmul.mubr.f32.gmra.mrb[0].mxu0 %v247
    %v315 = vpop.f32.mrb[0].mxu0
    %v316 = vadd.f32 0.0, %v315
    %v317 = vpop.f32.mrb[0].mxu0
    %318 = vdwg.mxu0
    %319 = vrot.lane.b32.xlu0 %v146, 120
    %v320 = vpop.permute.xlu0 %319
    %321 = vrot.lane.b32.xlu0 %v146, 88
    %v322 = vpop.permute.xlu0 %321
    %v323 = vsel %vm157, %v320, 0
    %v325 = vsel %vm157, %v322, 0
    %327 = vmatprep.subr.mxu0 0.0
    %328 = vmatpush1.xpose.msra.mxu0 %v325
    %329 = vmatprep.subr.mxu0 0.0
    %330 = vmatpush1.xpose.msra.mxu0 0.0
    %331 = vmatprep.subr.mxu0 0.0
    %332 = vmatpush1.xpose.msra.mxu0 0.0
    %333 = vmatprep.subr.mxu0 0.0
    %334 = vmatpush1.xpose.msra.mxu0 0.0
    %335 = vmatprep.subr.mxu0 0.0
    %336 = vmatpush1.xpose.msra.mxu0 0.0
    %337 = vmatprep.subr.mxu0 0.0
    %338 = vmatpush1.xpose.msra.mxu0 0.0
    %339 = vmatprep.subr.mxu0 0.0
    %340 = vmatpush1.xpose.msra.mxu0 0.0
    %341 = vmatprep.subr.mxu0 0.0
    %342 = vmatpush1.xpose.msra.mxu0 0.0
    %343 = vmatprep.subr.mxu0 0.0
    %344 = vmatpush1.xpose.msra.mxu0 0.0
    %345 = vmatprep.subr.mxu0 0.0
    %346 = vmatpush1.xpose.msra.mxu0 0.0
    %347 = vmatprep.subr.mxu0 0.0
    %348 = vmatpush1.xpose.msra.mxu0 0.0
    %349 = vmatprep.subr.mxu0 0.0
    %350 = vmatpush1.xpose.msra.mxu0 0.0
    %351 = vmatprep.subr.mxu0 0.0
    %352 = vmatpush1.xpose.msra.mxu0 0.0
    %353 = vmatprep.subr.mxu0 0.0
    %354 = vmatpush1.xpose.msra.mxu0 0.0
    %355 = vmatprep.subr.mxu0 0.0
    %356 = vmatpush1.xpose.msra.mxu0 0.0
    %357 = vmatprep.subr.mxu0 0.0
    %358 = vmatpush1.xpose.msra.mxu0 0.0
    %359 = vmatprep.subr.mxu0 0.0
    %360 = vmatpush1.xpose.msra.mxu0 0.0
    %361 = vmatprep.subr.mxu0 0.0
    %362 = vmatpush1.xpose.msra.mxu0 0.0
    %363 = vmatprep.subr.mxu0 0.0
    %364 = vmatpush1.xpose.msra.mxu0 0.0
    %365 = vmatprep.subr.mxu0 0.0
    %366 = vmatpush1.xpose.msra.mxu0 0.0
    %367 = vmatprep.subr.mxu0 0.0
    %368 = vmatpush1.xpose.msra.mxu0 0.0
    %369 = vmatprep.subr.mxu0 0.0
    %370 = vmatpush1.xpose.msra.mxu0 0.0
    %371 = vmatprep.subr.mxu0 0.0
    %372 = vmatpush1.xpose.msra.mxu0 0.0
    %373 = vmatprep.subr.mxu0 0.0
    %374 = vmatpush1.xpose.msra.mxu0 0.0
    %375 = vmatprep.subr.mxu0 0.0
    %376 = vmatpush1.xpose.msra.mxu0 0.0
    %377 = vmatprep.subr.mxu0 0.0
    %378 = vmatpush1.xpose.msra.mxu0 0.0
    %379 = vmatprep.subr.mxu0 0.0
    %380 = vmatpush1.xpose.msra.mxu0 0.0
    %381 = vmatprep.subr.mxu0 0.0
    %382 = vmatpush1.xpose.msra.mxu0 0.0
    %383 = vmatprep.subr.mxu0 0.0
    %384 = vmatpush1.xpose.msra.mxu0 0.0
    %385 = vmatprep.subr.mxu0 0.0
    %386 = vmatpush1.xpose.msra.mxu0 0.0
    %387 = vmatprep.subr.mxu0 0.0
    %388 = vmatpush1.xpose.msra.mxu0 0.0
    %389 = vmatprep.subr.mxu0 0.0
    %390 = vmatpush1.xpose.msra.mxu0 0.0
    %391 = vmatprep.mubr.f32.mxu0 0.0
    %392 = vmatmul.mubr.f32.gmra.mrb[0].mxu0 %v323
    %v393 = vpop.f32.mrb[0].mxu0
    %v394 = vadd.f32 0.0, %v393
    %v395 = vpop.f32.mrb[0].mxu0
    %396 = vdwg.mxu0
    %v397 = vsel %vm157, %v394, -inf
    %398 = vmax.xlane.f32.xlu0 %v397
    %v399 = vpop.xlane.xlu0 %398
    %v400 = vsub.f32 %v394, %v399
    %v401 = vmul.f32 %v400, 1.442695
    %v402 = vpow.pop %v401
    %v403 = vsel %vm157, %v402, 0.0
    %404 = vadd.xlane.f32.xlu0 %v403
    %v405 = vpop.xlane.xlu0 %404
    %v406 = vrcp.pop %v405
    %v407 = vmul.f32 %v402, %v406
    %408 = vrot.lane.b32.xlu0 %v146, 56
    %v409 = vpop.permute.xlu0 %408
    %v412 = vsel %vm157, %v407, 0
    %414 = vmatprep.subr.mxu0 0.0
    %415 = vmatpush1.msra.mxu0 %v409
    %416 = vmatprep.subr.mxu0 0.0
    %417 = vmatpush1.msra.mxu0 0.0
    %418 = vmatprep.subr.mxu0 0.0
    %419 = vmatpush1.msra.mxu0 0.0
    %420 = vmatprep.subr.mxu0 0.0
    %421 = vmatpush1.msra.mxu0 0.0
    %422 = vmatprep.subr.mxu0 0.0
    %423 = vmatpush1.msra.mxu0 0.0
    %424 = vmatprep.subr.mxu0 0.0
    %425 = vmatpush1.msra.mxu0 0.0
    %426 = vmatprep.subr.mxu0 0.0
    %427 = vmatpush1.msra.mxu0 0.0
    %428 = vmatprep.subr.mxu0 0.0
    %429 = vmatpush1.msra.mxu0 0.0
    %430 = vmatprep.subr.mxu0 0.0
    %431 = vmatpush1.msra.mxu0 0.0
    %432 = vmatprep.subr.mxu0 0.0
    %433 = vmatpush1.msra.mxu0 0.0
    %434 = vmatprep.subr.mxu0 0.0
    %435 = vmatpush1.msra.mxu0 0.0
    %436 = vmatprep.subr.mxu0 0.0
    %437 = vmatpush1.msra.mxu0 0.0
    %438 = vmatprep.subr.mxu0 0.0
    %439 = vmatpush1.msra.mxu0 0.0
    %440 = vmatprep.subr.mxu0 0.0
    %441 = vmatpush1.msra.mxu0 0.0
    %442 = vmatprep.subr.mxu0 0.0
    %443 = vmatpush1.msra.mxu0 0.0
    %444 = vmatprep.subr.mxu0 0.0
    %445 = vmatpush1.msra.mxu0 0.0
    %446 = vmatprep.subr.mxu0 0.0
    %447 = vmatpush1.msra.mxu0 0.0
    %448 = vmatprep.subr.mxu0 0.0
    %449 = vmatpush1.msra.mxu0 0.0
    %450 = vmatprep.subr.mxu0 0.0
    %451 = vmatpush1.msra.mxu0 0.0
    %452 = vmatprep.subr.mxu0 0.0
    %453 = vmatpush1.msra.mxu0 0.0
    %454 = vmatprep.subr.mxu0 0.0
    %455 = vmatpush1.msra.mxu0 0.0
    %456 = vmatprep.subr.mxu0 0.0
    %457 = vmatpush1.msra.mxu0 0.0
    %458 = vmatprep.subr.mxu0 0.0
    %459 = vmatpush1.msra.mxu0 0.0
    %460 = vmatprep.subr.mxu0 0.0
    %461 = vmatpush1.msra.mxu0 0.0
    %462 = vmatprep.subr.mxu0 0.0
    %463 = vmatpush1.msra.mxu0 0.0
    %464 = vmatprep.subr.mxu0 0.0
    %465 = vmatpush1.msra.mxu0 0.0
    %466 = vmatprep.subr.mxu0 0.0
    %467 = vmatpush1.msra.mxu0 0.0
    %468 = vmatprep.subr.mxu0 0.0
    %469 = vmatpush1.msra.mxu0 0.0
    %470 = vmatprep.subr.mxu0 0.0
    %471 = vmatpush1.msra.mxu0 0.0
    %472 = vmatprep.subr.mxu0 0.0
    %473 = vmatpush1.msra.mxu0 0.0
    %474 = vmatprep.subr.mxu0 0.0
    %475 = vmatpush1.msra.mxu0 0.0
    %476 = vmatprep.subr.mxu0 0.0
    %477 = vmatpush1.msra.mxu0 0.0
    %478 = vmatprep.mubr.f32.mxu0 0.0
    %479 = vmatmul.mubr.f32.gmra.mrb[0].mxu0 %v412
    %v480 = vpop.f32.mrb[0].mxu0
    %v481 = vadd.f32 0.0, %v480
    %v482 = vpop.f32.mrb[0].mxu0
    %483 = vdwg.mxu0
    %484 = vrot.lane.b32.xlu0 %v146, 112
    %v485 = vpop.permute.xlu0 %484
    %486 = vrot.lane.b32.xlu0 %v146, 80
    %v487 = vpop.permute.xlu0 %486
    %v488 = vsel %vm157, %v485, 0
    %v490 = vsel %vm157, %v487, 0
    %492 = vmatprep.subr.mxu0 0.0
    %493 = vmatpush1.xpose.msra.mxu0 %v490
    %494 = vmatprep.subr.mxu0 0.0
    %495 = vmatpush1.xpose.msra.mxu0 0.0
    %496 = vmatprep.subr.mxu0 0.0
    %497 = vmatpush1.xpose.msra.mxu0 0.0
    %498 = vmatprep.subr.mxu0 0.0
    %499 = vmatpush1.xpose.msra.mxu0 0.0
    %500 = vmatprep.subr.mxu0 0.0
    %501 = vmatpush1.xpose.msra.mxu0 0.0
    %502 = vmatprep.subr.mxu0 0.0
    %503 = vmatpush1.xpose.msra.mxu0 0.0
    %504 = vmatprep.subr.mxu0 0.0
    %505 = vmatpush1.xpose.msra.mxu0 0.0
    %506 = vmatprep.subr.mxu0 0.0
    %507 = vmatpush1.xpose.msra.mxu0 0.0
    %508 = vmatprep.subr.mxu0 0.0
    %509 = vmatpush1.xpose.msra.mxu0 0.0
    %510 = vmatprep.subr.mxu0 0.0
    %511 = vmatpush1.xpose.msra.mxu0 0.0
    %512 = vmatprep.subr.mxu0 0.0
    %513 = vmatpush1.xpose.msra.mxu0 0.0
    %514 = vmatprep.subr.mxu0 0.0
    %515 = vmatpush1.xpose.msra.mxu0 0.0
    %516 = vmatprep.subr.mxu0 0.0
    %517 = vmatpush1.xpose.msra.mxu0 0.0
    %518 = vmatprep.subr.mxu0 0.0
    %519 = vmatpush1.xpose.msra.mxu0 0.0
    %520 = vmatprep.subr.mxu0 0.0
    %521 = vmatpush1.xpose.msra.mxu0 0.0
    %522 = vmatprep.subr.mxu0 0.0
    %523 = vmatpush1.xpose.msra.mxu0 0.0
    %524 = vmatprep.subr.mxu0 0.0
    %525 = vmatpush1.xpose.msra.mxu0 0.0
    %526 = vmatprep.subr.mxu0 0.0
    %527 = vmatpush1.xpose.msra.mxu0 0.0
    %528 = vmatprep.subr.mxu0 0.0
    %529 = vmatpush1.xpose.msra.mxu0 0.0
    %530 = vmatprep.subr.mxu0 0.0
    %531 = vmatpush1.xpose.msra.mxu0 0.0
    %532 = vmatprep.subr.mxu0 0.0
    %533 = vmatpush1.xpose.msra.mxu0 0.0
    %534 = vmatprep.subr.mxu0 0.0
    %535 = vmatpush1.xpose.msra.mxu0 0.0
    %536 = vmatprep.subr.mxu0 0.0
    %537 = vmatpush1.xpose.msra.mxu0 0.0
    %538 = vmatprep.subr.mxu0 0.0
    %539 = vmatpush1.xpose.msra.mxu0 0.0
    %540 = vmatprep.subr.mxu0 0.0
    %541 = vmatpush1.xpose.msra.mxu0 0.0
    %542 = vmatprep.subr.mxu0 0.0
    %543 = vmatpush1.xpose.msra.mxu0 0.0
    %544 = vmatprep.subr.mxu0 0.0
    %545 = vmatpush1.xpose.msra.mxu0 0.0
    %546 = vmatprep.subr.mxu0 0.0
    %547 = vmatpush1.xpose.msra.mxu0 0.0
    %548 = vmatprep.subr.mxu0 0.0
    %549 = vmatpush1.xpose.msra.mxu0 0.0
    %550 = vmatprep.subr.mxu0 0.0
    %551 = vmatpush1.xpose.msra.mxu0 0.0
    %552 = vmatprep.subr.mxu0 0.0
    %553 = vmatpush1.xpose.msra.mxu0 0.0
    %554 = vmatprep.subr.mxu0 0.0
    %555 = vmatpush1.xpose.msra.mxu0 0.0
    %556 = vmatprep.mubr.f32.mxu0 0.0
    %557 = vmatmul.mubr.f32.gmra.mrb[0].mxu0 %v488
    %v558 = vpop.f32.mrb[0].mxu0
    %v559 = vadd.f32 0.0, %v558
    %v560 = vpop.f32.mrb[0].mxu0
    %561 = vdwg.mxu0
    %v562 = vsel %vm157, %v559, -inf
    %563 = vmax.xlane.f32.xlu0 %v562
    %v564 = vpop.xlane.xlu0 %563
    %v565 = vsub.f32 %v559, %v564
    %v566 = vmul.f32 %v565, 1.442695
    %v567 = vpow.pop %v566
    %v568 = vsel %vm157, %v567, 0.0
    %569 = vadd.xlane.f32.xlu0 %v568
    %v570 = vpop.xlane.xlu0 %569
    %v571 = vrcp.pop %v570
    %v572 = vmul.f32 %v567, %v571
    %573 = vrot.lane.b32.xlu0 %v146, 48
    %v574 = vpop.permute.xlu0 %573
    %v577 = vsel %vm157, %v572, 0
    %579 = vmatprep.subr.mxu0 0.0
    %580 = vmatpush1.msra.mxu0 %v574
    %581 = vmatprep.subr.mxu0 0.0
    %582 = vmatpush1.msra.mxu0 0.0
    %583 = vmatprep.subr.mxu0 0.0
    %584 = vmatpush1.msra.mxu0 0.0
    %585 = vmatprep.subr.mxu0 0.0
    %586 = vmatpush1.msra.mxu0 0.0
    %587 = vmatprep.subr.mxu0 0.0
    %588 = vmatpush1.msra.mxu0 0.0
    %589 = vmatprep.subr.mxu0 0.0
    %590 = vmatpush1.msra.mxu0 0.0
    %591 = vmatprep.subr.mxu0 0.0
    %592 = vmatpush1.msra.mxu0 0.0
    %593 = vmatprep.subr.mxu0 0.0
    %594 = vmatpush1.msra.mxu0 0.0
    %595 = vmatprep.subr.mxu0 0.0
    %596 = vmatpush1.msra.mxu0 0.0
    %597 = vmatprep.subr.mxu0 0.0
    %598 = vmatpush1.msra.mxu0 0.0
    %599 = vmatprep.subr.mxu0 0.0
    %600 = vmatpush1.msra.mxu0 0.0
    %601 = vmatprep.subr.mxu0 0.0
    %602 = vmatpush1.msra.mxu0 0.0
    %603 = vmatprep.subr.mxu0 0.0
    %604 = vmatpush1.msra.mxu0 0.0
    %605 = vmatprep.subr.mxu0 0.0
    %606 = vmatpush1.msra.mxu0 0.0
    %607 = vmatprep.subr.mxu0 0.0
    %608 = vmatpush1.msra.mxu0 0.0
    %609 = vmatprep.subr.mxu0 0.0
    %610 = vmatpush1.msra.mxu0 0.0
    %611 = vmatprep.subr.mxu0 0.0
    %612 = vmatpush1.msra.mxu0 0.0
    %613 = vmatprep.subr.mxu0 0.0
    %614 = vmatpush1.msra.mxu0 0.0
    %615 = vmatprep.subr.mxu0 0.0
    %616 = vmatpush1.msra.mxu0 0.0
    %617 = vmatprep.subr.mxu0 0.0
    %618 = vmatpush1.msra.mxu0 0.0
    %619 = vmatprep.subr.mxu0 0.0
    %620 = vmatpush1.msra.mxu0 0.0
    %621 = vmatprep.subr.mxu0 0.0
    %622 = vmatpush1.msra.mxu0 0.0
    %623 = vmatprep.subr.mxu0 0.0
    %624 = vmatpush1.msra.mxu0 0.0
    %625 = vmatprep.subr.mxu0 0.0
    %626 = vmatpush1.msra.mxu0 0.0
    %627 = vmatprep.subr.mxu0 0.0
    %628 = vmatpush1.msra.mxu0 0.0
    %629 = vmatprep.subr.mxu0 0.0
    %630 = vmatpush1.msra.mxu0 0.0
    %631 = vmatprep.subr.mxu0 0.0
    %632 = vmatpush1.msra.mxu0 0.0
    %633 = vmatprep.subr.mxu0 0.0
    %634 = vmatpush1.msra.mxu0 0.0
    %635 = vmatprep.subr.mxu0 0.0
    %636 = vmatpush1.msra.mxu0 0.0
    %637 = vmatprep.subr.mxu0 0.0
    %638 = vmatpush1.msra.mxu0 0.0
    %639 = vmatprep.subr.mxu0 0.0
    %640 = vmatpush1.msra.mxu0 0.0
    %641 = vmatprep.subr.mxu0 0.0
    %642 = vmatpush1.msra.mxu0 0.0
    %643 = vmatprep.mubr.f32.mxu0 0.0
    %644 = vmatmul.mubr.f32.gmra.mrb[0].mxu0 %v577
    %v645 = vpop.f32.mrb[0].mxu0
    %v646 = vadd.f32 0.0, %v645
    %v647 = vpop.f32.mrb[0].mxu0
    %648 = vdwg.mxu0
    %649 = vrot.lane.b32.xlu0 %v146, 104
    %v650 = vpop.permute.xlu0 %649
    %651 = vrot.lane.b32.xlu0 %v146, 72
    %v652 = vpop.permute.xlu0 %651
    %v653 = vsel %vm157, %v650, 0
    %v655 = vsel %vm157, %v652, 0
    %657 = vmatprep.subr.mxu0 0.0
    %658 = vmatpush1.xpose.msra.mxu0 %v655
    %659 = vmatprep.subr.mxu0 0.0
    %660 = vmatpush1.xpose.msra.mxu0 0.0
    %661 = vmatprep.subr.mxu0 0.0
    %662 = vmatpush1.xpose.msra.mxu0 0.0
    %663 = vmatprep.subr.mxu0 0.0
    %664 = vmatpush1.xpose.msra.mxu0 0.0
    %665 = vmatprep.subr.mxu0 0.0
    %666 = vmatpush1.xpose.msra.mxu0 0.0
    %667 = vmatprep.subr.mxu0 0.0
    %668 = vmatpush1.xpose.msra.mxu0 0.0
    %669 = vmatprep.subr.mxu0 0.0
    %670 = vmatpush1.xpose.msra.mxu0 0.0
    %671 = vmatprep.subr.mxu0 0.0
    %672 = vmatpush1.xpose.msra.mxu0 0.0
    %673 = vmatprep.subr.mxu0 0.0
    %674 = vmatpush1.xpose.msra.mxu0 0.0
    %675 = vmatprep.subr.mxu0 0.0
    %676 = vmatpush1.xpose.msra.mxu0 0.0
    %677 = vmatprep.subr.mxu0 0.0
    %678 = vmatpush1.xpose.msra.mxu0 0.0
    %679 = vmatprep.subr.mxu0 0.0
    %680 = vmatpush1.xpose.msra.mxu0 0.0
    %681 = vmatprep.subr.mxu0 0.0
    %682 = vmatpush1.xpose.msra.mxu0 0.0
    %683 = vmatprep.subr.mxu0 0.0
    %684 = vmatpush1.xpose.msra.mxu0 0.0
    %685 = vmatprep.subr.mxu0 0.0
    %686 = vmatpush1.xpose.msra.mxu0 0.0
    %687 = vmatprep.subr.mxu0 0.0
    %688 = vmatpush1.xpose.msra.mxu0 0.0
    %689 = vmatprep.subr.mxu0 0.0
    %690 = vmatpush1.xpose.msra.mxu0 0.0
    %691 = vmatprep.subr.mxu0 0.0
    %692 = vmatpush1.xpose.msra.mxu0 0.0
    %693 = vmatprep.subr.mxu0 0.0
    %694 = vmatpush1.xpose.msra.mxu0 0.0
    %695 = vmatprep.subr.mxu0 0.0
    %696 = vmatpush1.xpose.msra.mxu0 0.0
    %697 = vmatprep.subr.mxu0 0.0
    %698 = vmatpush1.xpose.msra.mxu0 0.0
    %699 = vmatprep.subr.mxu0 0.0
    %700 = vmatpush1.xpose.msra.mxu0 0.0
    %701 = vmatprep.subr.mxu0 0.0
    %702 = vmatpush1.xpose.msra.mxu0 0.0
    %703 = vmatprep.subr.mxu0 0.0
    %704 = vmatpush1.xpose.msra.mxu0 0.0
    %705 = vmatprep.subr.mxu0 0.0
    %706 = vmatpush1.xpose.msra.mxu0 0.0
    %707 = vmatprep.subr.mxu0 0.0
    %708 = vmatpush1.xpose.msra.mxu0 0.0
    %709 = vmatprep.subr.mxu0 0.0
    %710 = vmatpush1.xpose.msra.mxu0 0.0
    %711 = vmatprep.subr.mxu0 0.0
    %712 = vmatpush1.xpose.msra.mxu0 0.0
    %713 = vmatprep.subr.mxu0 0.0
    %714 = vmatpush1.xpose.msra.mxu0 0.0
    %715 = vmatprep.subr.mxu0 0.0
    %716 = vmatpush1.xpose.msra.mxu0 0.0
    %717 = vmatprep.subr.mxu0 0.0
    %718 = vmatpush1.xpose.msra.mxu0 0.0
    %719 = vmatprep.subr.mxu0 0.0
    %720 = vmatpush1.xpose.msra.mxu0 0.0
    %721 = vmatprep.mubr.f32.mxu0 0.0
    %722 = vmatmul.mubr.f32.gmra.mrb[0].mxu0 %v653
    %v723 = vpop.f32.mrb[0].mxu0
    %v724 = vadd.f32 0.0, %v723
    %v725 = vpop.f32.mrb[0].mxu0
    %726 = vdwg.mxu0
    %v727 = vsel %vm157, %v724, -inf
    %728 = vmax.xlane.f32.xlu0 %v727
    %v729 = vpop.xlane.xlu0 %728
    %v730 = vsub.f32 %v724, %v729
    %v731 = vmul.f32 %v730, 1.442695
    %v732 = vpow.pop %v731
    %v733 = vsel %vm157, %v732, 0.0
    %734 = vadd.xlane.f32.xlu0 %v733
    %v735 = vpop.xlane.xlu0 %734
    %v736 = vrcp.pop %v735
    %v737 = vmul.f32 %v732, %v736
    %738 = vrot.lane.b32.xlu0 %v146, 40
    %v739 = vpop.permute.xlu0 %738
    %v742 = vsel %vm157, %v737, 0
    %744 = vmatprep.subr.mxu0 0.0
    %745 = vmatpush1.msra.mxu0 %v739
    %746 = vmatprep.subr.mxu0 0.0
    %747 = vmatpush1.msra.mxu0 0.0
    %748 = vmatprep.subr.mxu0 0.0
    %749 = vmatpush1.msra.mxu0 0.0
    %750 = vmatprep.subr.mxu0 0.0
    %751 = vmatpush1.msra.mxu0 0.0
    %752 = vmatprep.subr.mxu0 0.0
    %753 = vmatpush1.msra.mxu0 0.0
    %754 = vmatprep.subr.mxu0 0.0
    %755 = vmatpush1.msra.mxu0 0.0
    %756 = vmatprep.subr.mxu0 0.0
    %757 = vmatpush1.msra.mxu0 0.0
    %758 = vmatprep.subr.mxu0 0.0
    %759 = vmatpush1.msra.mxu0 0.0
    %760 = vmatprep.subr.mxu0 0.0
    %761 = vmatpush1.msra.mxu0 0.0
    %762 = vmatprep.subr.mxu0 0.0
    %763 = vmatpush1.msra.mxu0 0.0
    %764 = vmatprep.subr.mxu0 0.0
    %765 = vmatpush1.msra.mxu0 0.0
    %766 = vmatprep.subr.mxu0 0.0
    %767 = vmatpush1.msra.mxu0 0.0
    %768 = vmatprep.subr.mxu0 0.0
    %769 = vmatpush1.msra.mxu0 0.0
    %770 = vmatprep.subr.mxu0 0.0
    %771 = vmatpush1.msra.mxu0 0.0
    %772 = vmatprep.subr.mxu0 0.0
    %773 = vmatpush1.msra.mxu0 0.0
    %774 = vmatprep.subr.mxu0 0.0
    %775 = vmatpush1.msra.mxu0 0.0
    %776 = vmatprep.subr.mxu0 0.0
    %777 = vmatpush1.msra.mxu0 0.0
    %778 = vmatprep.subr.mxu0 0.0
    %779 = vmatpush1.msra.mxu0 0.0
    %780 = vmatprep.subr.mxu0 0.0
    %781 = vmatpush1.msra.mxu0 0.0
    %782 = vmatprep.subr.mxu0 0.0
    %783 = vmatpush1.msra.mxu0 0.0
    %784 = vmatprep.subr.mxu0 0.0
    %785 = vmatpush1.msra.mxu0 0.0
    %786 = vmatprep.subr.mxu0 0.0
    %787 = vmatpush1.msra.mxu0 0.0
    %788 = vmatprep.subr.mxu0 0.0
    %789 = vmatpush1.msra.mxu0 0.0
    %790 = vmatprep.subr.mxu0 0.0
    %791 = vmatpush1.msra.mxu0 0.0
    %792 = vmatprep.subr.mxu0 0.0
    %793 = vmatpush1.msra.mxu0 0.0
    %794 = vmatprep.subr.mxu0 0.0
    %795 = vmatpush1.msra.mxu0 0.0
    %796 = vmatprep.subr.mxu0 0.0
    %797 = vmatpush1.msra.mxu0 0.0
    %798 = vmatprep.subr.mxu0 0.0
    %799 = vmatpush1.msra.mxu0 0.0
    %800 = vmatprep.subr.mxu0 0.0
    %801 = vmatpush1.msra.mxu0 0.0
    %802 = vmatprep.subr.mxu0 0.0
    %803 = vmatpush1.msra.mxu0 0.0
    %804 = vmatprep.subr.mxu0 0.0
    %805 = vmatpush1.msra.mxu0 0.0
    %806 = vmatprep.subr.mxu0 0.0
    %807 = vmatpush1.msra.mxu0 0.0
    %808 = vmatprep.mubr.f32.mxu0 0.0
    %809 = vmatmul.mubr.f32.gmra.mrb[0].mxu0 %v742
    %v810 = vpop.f32.mrb[0].mxu0
    %v811 = vadd.f32 0.0, %v810
    %v812 = vpop.f32.mrb[0].mxu0
    %813 = vdwg.mxu0
    %815 = vrot.lane.b32.xlu0 %v481, 8
    %v816 = vpop.permute.xlu0 %815
    %819 = vrot.lane.b32.xlu0 %v646, 16
    %v820 = vpop.permute.xlu0 %819
    %823 = vrot.lane.b32.xlu0 %v811, 24
    %v824 = vpop.permute.xlu0 %823
    %v826 = vsel %vm157, %v316, %v816
    %vm827 = vcmask 130048
    %v828 = vsel %vm827, %v826, %v820
    %vm829 = vcmask 195584
    %v830 = vsel %vm829, %v828, %v824
    %832 = vrot.lane.b32.xlu0 %v151, 96
    %v833 = vpop.permute.xlu0 %832
    %v834 = vsel %vm157, %v151, 0
    %v836 = vsel %vm157, %v833, 0
    %838 = vmatprep.subr.mxu0 0.0
    %839 = vmatpush1.xpose.msra.mxu0 %v836
    %840 = vmatprep.subr.mxu0 0.0
    %841 = vmatpush1.xpose.msra.mxu0 0.0
    %842 = vmatprep.subr.mxu0 0.0
    %843 = vmatpush1.xpose.msra.mxu0 0.0
    %844 = vmatprep.subr.mxu0 0.0
    %845 = vmatpush1.xpose.msra.mxu0 0.0
    %846 = vmatprep.subr.mxu0 0.0
    %847 = vmatpush1.xpose.msra.mxu0 0.0
    %848 = vmatprep.subr.mxu0 0.0
    %849 = vmatpush1.xpose.msra.mxu0 0.0
    %850 = vmatprep.subr.mxu0 0.0
    %851 = vmatpush1.xpose.msra.mxu0 0.0
    %852 = vmatprep.subr.mxu0 0.0
    %853 = vmatpush1.xpose.msra.mxu0 0.0
    %854 = vmatprep.subr.mxu0 0.0
    %855 = vmatpush1.xpose.msra.mxu0 0.0
    %856 = vmatprep.subr.mxu0 0.0
    %857 = vmatpush1.xpose.msra.mxu0 0.0
    %858 = vmatprep.subr.mxu0 0.0
    %859 = vmatpush1.xpose.msra.mxu0 0.0
    %860 = vmatprep.subr.mxu0 0.0
    %861 = vmatpush1.xpose.msra.mxu0 0.0
    %862 = vmatprep.subr.mxu0 0.0
    %863 = vmatpush1.xpose.msra.mxu0 0.0
    %864 = vmatprep.subr.mxu0 0.0
    %865 = vmatpush1.xpose.msra.mxu0 0.0
    %866 = vmatprep.subr.mxu0 0.0
    %867 = vmatpush1.xpose.msra.mxu0 0.0
    %868 = vmatprep.subr.mxu0 0.0
    %869 = vmatpush1.xpose.msra.mxu0 0.0
    %870 = vmatprep.subr.mxu0 0.0
    %871 = vmatpush1.xpose.msra.mxu0 0.0
    %872 = vmatprep.subr.mxu0 0.0
    %873 = vmatpush1.xpose.msra.mxu0 0.0
    %874 = vmatprep.subr.mxu0 0.0
    %875 = vmatpush1.xpose.msra.mxu0 0.0
    %876 = vmatprep.subr.mxu0 0.0
    %877 = vmatpush1.xpose.msra.mxu0 0.0
    %878 = vmatprep.subr.mxu0 0.0
    %879 = vmatpush1.xpose.msra.mxu0 0.0
    %880 = vmatprep.subr.mxu0 0.0
    %881 = vmatpush1.xpose.msra.mxu0 0.0
    %882 = vmatprep.subr.mxu0 0.0
    %883 = vmatpush1.xpose.msra.mxu0 0.0
    %884 = vmatprep.subr.mxu0 0.0
    %885 = vmatpush1.xpose.msra.mxu0 0.0
    %886 = vmatprep.subr.mxu0 0.0
    %887 = vmatpush1.xpose.msra.mxu0 0.0
    %888 = vmatprep.subr.mxu0 0.0
    %889 = vmatpush1.xpose.msra.mxu0 0.0
    %890 = vmatprep.subr.mxu0 0.0
    %891 = vmatpush1.xpose.msra.mxu0 0.0
    %892 = vmatprep.subr.mxu0 0.0
    %893 = vmatpush1.xpose.msra.mxu0 0.0
    %894 = vmatprep.subr.mxu0 0.0
    %895 = vmatpush1.xpose.msra.mxu0 0.0
    %896 = vmatprep.subr.mxu0 0.0
    %897 = vmatpush1.xpose.msra.mxu0 0.0
    %898 = vmatprep.subr.mxu0 0.0
    %899 = vmatpush1.xpose.msra.mxu0 0.0
    %900 = vmatprep.subr.mxu0 0.0
    %901 = vmatpush1.xpose.msra.mxu0 0.0
    %902 = vmatprep.mubr.f32.mxu0 0.0
    %903 = vmatmul.mubr.f32.gmra.mrb[0].mxu0 %v834
    %v904 = vpop.f32.mrb[0].mxu0
    %v905 = vadd.f32 0.0, %v904
    %v906 = vpop.f32.mrb[0].mxu0
    %907 = vdwg.mxu0
    %v908 = vsel %vm157, %v905, -inf
    %909 = vmax.xlane.f32.xlu0 %v908
    %v910 = vpop.xlane.xlu0 %909
    %v911 = vsub.f32 %v905, %v910
    %v912 = vmul.f32 %v911, 1.442695
    %v913 = vpow.pop %v912
    %v914 = vsel %vm157, %v913, 0.0
    %915 = vadd.xlane.f32.xlu0 %v914
    %v916 = vpop.xlane.xlu0 %915
    %v917 = vrcp.pop %v916
    %v918 = vmul.f32 %v913, %v917
    %919 = vrot.lane.b32.xlu0 %v151, 64
    %v920 = vpop.permute.xlu0 %919
    %v923 = vsel %vm157, %v918, 0
    %925 = vmatprep.subr.mxu0 0.0
    %926 = vmatpush1.msra.mxu0 %v920
    %927 = vmatprep.subr.mxu0 0.0
    %928 = vmatpush1.msra.mxu0 0.0
    %929 = vmatprep.subr.mxu0 0.0
    %930 = vmatpush1.msra.mxu0 0.0
    %931 = vmatprep.subr.mxu0 0.0
    %932 = vmatpush1.msra.mxu0 0.0
    %933 = vmatprep.subr.mxu0 0.0
    %934 = vmatpush1.msra.mxu0 0.0
    %935 = vmatprep.subr.mxu0 0.0
    %936 = vmatpush1.msra.mxu0 0.0
    %937 = vmatprep.subr.mxu0 0.0
    %938 = vmatpush1.msra.mxu0 0.0
    %939 = vmatprep.subr.mxu0 0.0
    %940 = vmatpush1.msra.mxu0 0.0
    %941 = vmatprep.subr.mxu0 0.0
    %942 = vmatpush1.msra.mxu0 0.0
    %943 = vmatprep.subr.mxu0 0.0
    %944 = vmatpush1.msra.mxu0 0.0
    %945 = vmatprep.subr.mxu0 0.0
    %946 = vmatpush1.msra.mxu0 0.0
    %947 = vmatprep.subr.mxu0 0.0
    %948 = vmatpush1.msra.mxu0 0.0
    %949 = vmatprep.subr.mxu0 0.0
    %950 = vmatpush1.msra.mxu0 0.0
    %951 = vmatprep.subr.mxu0 0.0
    %952 = vmatpush1.msra.mxu0 0.0
    %953 = vmatprep.subr.mxu0 0.0
    %954 = vmatpush1.msra.mxu0 0.0
    %955 = vmatprep.subr.mxu0 0.0
    %956 = vmatpush1.msra.mxu0 0.0
    %957 = vmatprep.subr.mxu0 0.0
    %958 = vmatpush1.msra.mxu0 0.0
    %959 = vmatprep.subr.mxu0 0.0
    %960 = vmatpush1.msra.mxu0 0.0
    %961 = vmatprep.subr.mxu0 0.0
    %962 = vmatpush1.msra.mxu0 0.0
    %963 = vmatprep.subr.mxu0 0.0
    %964 = vmatpush1.msra.mxu0 0.0
    %965 = vmatprep.subr.mxu0 0.0
    %966 = vmatpush1.msra.mxu0 0.0
    %967 = vmatprep.subr.mxu0 0.0
    %968 = vmatpush1.msra.mxu0 0.0
    %969 = vmatprep.subr.mxu0 0.0
    %970 = vmatpush1.msra.mxu0 0.0
    %971 = vmatprep.subr.mxu0 0.0
    %972 = vmatpush1.msra.mxu0 0.0
    %973 = vmatprep.subr.mxu0 0.0
    %974 = vmatpush1.msra.mxu0 0.0
    %975 = vmatprep.subr.mxu0 0.0
    %976 = vmatpush1.msra.mxu0 0.0
    %977 = vmatprep.subr.mxu0 0.0
    %978 = vmatpush1.msra.mxu0 0.0
    %979 = vmatprep.subr.mxu0 0.0
    %980 = vmatpush1.msra.mxu0 0.0
    %981 = vmatprep.subr.mxu0 0.0
    %982 = vmatpush1.msra.mxu0 0.0
    %983 = vmatprep.subr.mxu0 0.0
    %984 = vmatpush1.msra.mxu0 0.0
    %985 = vmatprep.subr.mxu0 0.0
    %986 = vmatpush1.msra.mxu0 0.0
    %987 = vmatprep.subr.mxu0 0.0
    %988 = vmatpush1.msra.mxu0 0.0
    %989 = vmatprep.mubr.f32.mxu0 0.0
    %990 = vmatmul.mubr.f32.gmra.mrb[0].mxu0 %v923
    %v991 = vpop.f32.mrb[0].mxu0
    %v992 = vadd.f32 0.0, %v991
    %v993 = vpop.f32.mrb[0].mxu0
    %994 = vdwg.mxu0
    %995 = vrot.lane.b32.xlu0 %v151, 120
    %v996 = vpop.permute.xlu0 %995
    %997 = vrot.lane.b32.xlu0 %v151, 88
    %v998 = vpop.permute.xlu0 %997
    %v999 = vsel %vm157, %v996, 0
    %v1001 = vsel %vm157, %v998, 0
    %1003 = vmatprep.subr.mxu0 0.0
    %1004 = vmatpush1.xpose.msra.mxu0 %v1001
    %1005 = vmatprep.subr.mxu0 0.0
    %1006 = vmatpush1.xpose.msra.mxu0 0.0
    %1007 = vmatprep.subr.mxu0 0.0
    %1008 = vmatpush1.xpose.msra.mxu0 0.0
    %1009 = vmatprep.subr.mxu0 0.0
    %1010 = vmatpush1.xpose.msra.mxu0 0.0
    %1011 = vmatprep.subr.mxu0 0.0
    %1012 = vmatpush1.xpose.msra.mxu0 0.0
    %1013 = vmatprep.subr.mxu0 0.0
    %1014 = vmatpush1.xpose.msra.mxu0 0.0
    %1015 = vmatprep.subr.mxu0 0.0
    %1016 = vmatpush1.xpose.msra.mxu0 0.0
    %1017 = vmatprep.subr.mxu0 0.0
    %1018 = vmatpush1.xpose.msra.mxu0 0.0
    %1019 = vmatprep.subr.mxu0 0.0
    %1020 = vmatpush1.xpose.msra.mxu0 0.0
    %1021 = vmatprep.subr.mxu0 0.0
    %1022 = vmatpush1.xpose.msra.mxu0 0.0
    %1023 = vmatprep.subr.mxu0 0.0
    %1024 = vmatpush1.xpose.msra.mxu0 0.0
    %1025 = vmatprep.subr.mxu0 0.0
    %1026 = vmatpush1.xpose.msra.mxu0 0.0
    %1027 = vmatprep.subr.mxu0 0.0
    %1028 = vmatpush1.xpose.msra.mxu0 0.0
    %1029 = vmatprep.subr.mxu0 0.0
    %1030 = vmatpush1.xpose.msra.mxu0 0.0
    %1031 = vmatprep.subr.mxu0 0.0
    %1032 = vmatpush1.xpose.msra.mxu0 0.0
    %1033 = vmatprep.subr.mxu0 0.0
    %1034 = vmatpush1.xpose.msra.mxu0 0.0
    %1035 = vmatprep.subr.mxu0 0.0
    %1036 = vmatpush1.xpose.msra.mxu0 0.0
    %1037 = vmatprep.subr.mxu0 0.0
    %1038 = vmatpush1.xpose.msra.mxu0 0.0
    %1039 = vmatprep.subr.mxu0 0.0
    %1040 = vmatpush1.xpose.msra.mxu0 0.0
    %1041 = vmatprep.subr.mxu0 0.0
    %1042 = vmatpush1.xpose.msra.mxu0 0.0
    %1043 = vmatprep.subr.mxu0 0.0
    %1044 = vmatpush1.xpose.msra.mxu0 0.0
    %1045 = vmatprep.subr.mxu0 0.0
    %1046 = vmatpush1.xpose.msra.mxu0 0.0
    %1047 = vmatprep.subr.mxu0 0.0
    %1048 = vmatpush1.xpose.msra.mxu0 0.0
    %1049 = vmatprep.subr.mxu0 0.0
    %1050 = vmatpush1.xpose.msra.mxu0 0.0
    %1051 = vmatprep.subr.mxu0 0.0
    %1052 = vmatpush1.xpose.msra.mxu0 0.0
    %1053 = vmatprep.subr.mxu0 0.0
    %1054 = vmatpush1.xpose.msra.mxu0 0.0
    %1055 = vmatprep.subr.mxu0 0.0
    %1056 = vmatpush1.xpose.msra.mxu0 0.0
    %1057 = vmatprep.subr.mxu0 0.0
    %1058 = vmatpush1.xpose.msra.mxu0 0.0
    %1059 = vmatprep.subr.mxu0 0.0
    %1060 = vmatpush1.xpose.msra.mxu0 0.0
    %1061 = vmatprep.subr.mxu0 0.0
    %1062 = vmatpush1.xpose.msra.mxu0 0.0
    %1063 = vmatprep.subr.mxu0 0.0
    %1064 = vmatpush1.xpose.msra.mxu0 0.0
    %1065 = vmatprep.subr.mxu0 0.0
    %1066 = vmatpush1.xpose.msra.mxu0 0.0
    %1067 = vmatprep.mubr.f32.mxu0 0.0
    %1068 = vmatmul.mubr.f32.gmra.mrb[0].mxu0 %v999
    %v1069 = vpop.f32.mrb[0].mxu0
    %v1070 = vadd.f32 0.0, %v1069
    %v1071 = vpop.f32.mrb[0].mxu0
    %1072 = vdwg.mxu0
    %v1073 = vsel %vm157, %v1070, -inf
    %1074 = vmax.xlane.f32.xlu0 %v1073
    %v1075 = vpop.xlane.xlu0 %1074
    %v1076 = vsub.f32 %v1070, %v1075
    %v1077 = vmul.f32 %v1076, 1.442695
    %v1078 = vpow.pop %v1077
    %v1079 = vsel %vm157, %v1078, 0.0
    %1080 = vadd.xlane.f32.xlu0 %v1079
    %v1081 = vpop.xlane.xlu0 %1080
    %v1082 = vrcp.pop %v1081
    %v1083 = vmul.f32 %v1078, %v1082
    %1084 = vrot.lane.b32.xlu0 %v151, 56
    %v1085 = vpop.permute.xlu0 %1084
    %v1088 = vsel %vm157, %v1083, 0
    %1090 = vmatprep.subr.mxu0 0.0
    %1091 = vmatpush1.msra.mxu0 %v1085
    %1092 = vmatprep.subr.mxu0 0.0
    %1093 = vmatpush1.msra.mxu0 0.0
    %1094 = vmatprep.subr.mxu0 0.0
    %1095 = vmatpush1.msra.mxu0 0.0
    %1096 = vmatprep.subr.mxu0 0.0
    %1097 = vmatpush1.msra.mxu0 0.0
    %1098 = vmatprep.subr.mxu0 0.0
    %1099 = vmatpush1.msra.mxu0 0.0
    %1100 = vmatprep.subr.mxu0 0.0
    %1101 = vmatpush1.msra.mxu0 0.0
    %1102 = vmatprep.subr.mxu0 0.0
    %1103 = vmatpush1.msra.mxu0 0.0
    %1104 = vmatprep.subr.mxu0 0.0
    %1105 = vmatpush1.msra.mxu0 0.0
    %1106 = vmatprep.subr.mxu0 0.0
    %1107 = vmatpush1.msra.mxu0 0.0
    %1108 = vmatprep.subr.mxu0 0.0
    %1109 = vmatpush1.msra.mxu0 0.0
    %1110 = vmatprep.subr.mxu0 0.0
    %1111 = vmatpush1.msra.mxu0 0.0
    %1112 = vmatprep.subr.mxu0 0.0
    %1113 = vmatpush1.msra.mxu0 0.0
    %1114 = vmatprep.subr.mxu0 0.0
    %1115 = vmatpush1.msra.mxu0 0.0
    %1116 = vmatprep.subr.mxu0 0.0
    %1117 = vmatpush1.msra.mxu0 0.0
    %1118 = vmatprep.subr.mxu0 0.0
    %1119 = vmatpush1.msra.mxu0 0.0
    %1120 = vmatprep.subr.mxu0 0.0
    %1121 = vmatpush1.msra.mxu0 0.0
    %1122 = vmatprep.subr.mxu0 0.0
    %1123 = vmatpush1.msra.mxu0 0.0
    %1124 = vmatprep.subr.mxu0 0.0
    %1125 = vmatpush1.msra.mxu0 0.0
    %1126 = vmatprep.subr.mxu0 0.0
    %1127 = vmatpush1.msra.mxu0 0.0
    %1128 = vmatprep.subr.mxu0 0.0
    %1129 = vmatpush1.msra.mxu0 0.0
    %1130 = vmatprep.subr.mxu0 0.0
    %1131 = vmatpush1.msra.mxu0 0.0
    %1132 = vmatprep.subr.mxu0 0.0
    %1133 = vmatpush1.msra.mxu0 0.0
    %1134 = vmatprep.subr.mxu0 0.0
    %1135 = vmatpush1.msra.mxu0 0.0
    %1136 = vmatprep.subr.mxu0 0.0
    %1137 = vmatpush1.msra.mxu0 0.0
    %1138 = vmatprep.subr.mxu0 0.0
    %1139 = vmatpush1.msra.mxu0 0.0
    %1140 = vmatprep.subr.mxu0 0.0
    %1141 = vmatpush1.msra.mxu0 0.0
    %1142 = vmatprep.subr.mxu0 0.0
    %1143 = vmatpush1.msra.mxu0 0.0
    %1144 = vmatprep.subr.mxu0 0.0
    %1145 = vmatpush1.msra.mxu0 0.0
    %1146 = vmatprep.subr.mxu0 0.0
    %1147 = vmatpush1.msra.mxu0 0.0
    %1148 = vmatprep.subr.mxu0 0.0
    %1149 = vmatpush1.msra.mxu0 0.0
    %1150 = vmatprep.subr.mxu0 0.0
    %1151 = vmatpush1.msra.mxu0 0.0
    %1152 = vmatprep.subr.mxu0 0.0
    %1153 = vmatpush1.msra.mxu0 0.0
    %1154 = vmatprep.mubr.f32.mxu0 0.0
    %1155 = vmatmul.mubr.f32.gmra.mrb[0].mxu0 %v1088
    %v1156 = vpop.f32.mrb[0].mxu0
    %v1157 = vadd.f32 0.0, %v1156
    %v1158 = vpop.f32.mrb[0].mxu0
    %1159 = vdwg.mxu0
    %1160 = vrot.lane.b32.xlu0 %v151, 112
    %v1161 = vpop.permute.xlu0 %1160
    %1162 = vrot.lane.b32.xlu0 %v151, 80
    %v1163 = vpop.permute.xlu0 %1162
    %v1164 = vsel %vm157, %v1161, 0
    %v1166 = vsel %vm157, %v1163, 0
    %1168 = vmatprep.subr.mxu0 0.0
    %1169 = vmatpush1.xpose.msra.mxu0 %v1166
    %1170 = vmatprep.subr.mxu0 0.0
    %1171 = vmatpush1.xpose.msra.mxu0 0.0
    %1172 = vmatprep.subr.mxu0 0.0
    %1173 = vmatpush1.xpose.msra.mxu0 0.0
    %1174 = vmatprep.subr.mxu0 0.0
    %1175 = vmatpush1.xpose.msra.mxu0 0.0
    %1176 = vmatprep.subr.mxu0 0.0
    %1177 = vmatpush1.xpose.msra.mxu0 0.0
    %1178 = vmatprep.subr.mxu0 0.0
    %1179 = vmatpush1.xpose.msra.mxu0 0.0
    %1180 = vmatprep.subr.mxu0 0.0
    %1181 = vmatpush1.xpose.msra.mxu0 0.0
    %1182 = vmatprep.subr.mxu0 0.0
    %1183 = vmatpush1.xpose.msra.mxu0 0.0
    %1184 = vmatprep.subr.mxu0 0.0
    %1185 = vmatpush1.xpose.msra.mxu0 0.0
    %1186 = vmatprep.subr.mxu0 0.0
    %1187 = vmatpush1.xpose.msra.mxu0 0.0
    %1188 = vmatprep.subr.mxu0 0.0
    %1189 = vmatpush1.xpose.msra.mxu0 0.0
    %1190 = vmatprep.subr.mxu0 0.0
    %1191 = vmatpush1.xpose.msra.mxu0 0.0
    %1192 = vmatprep.subr.mxu0 0.0
    %1193 = vmatpush1.xpose.msra.mxu0 0.0
    %1194 = vmatprep.subr.mxu0 0.0
    %1195 = vmatpush1.xpose.msra.mxu0 0.0
    %1196 = vmatprep.subr.mxu0 0.0
    %1197 = vmatpush1.xpose.msra.mxu0 0.0
    %1198 = vmatprep.subr.mxu0 0.0
    %1199 = vmatpush1.xpose.msra.mxu0 0.0
    %1200 = vmatprep.subr.mxu0 0.0
    %1201 = vmatpush1.xpose.msra.mxu0 0.0
    %1202 = vmatprep.subr.mxu0 0.0
    %1203 = vmatpush1.xpose.msra.mxu0 0.0
    %1204 = vmatprep.subr.mxu0 0.0
    %1205 = vmatpush1.xpose.msra.mxu0 0.0
    %1206 = vmatprep.subr.mxu0 0.0
    %1207 = vmatpush1.xpose.msra.mxu0 0.0
    %1208 = vmatprep.subr.mxu0 0.0
    %1209 = vmatpush1.xpose.msra.mxu0 0.0
    %1210 = vmatprep.subr.mxu0 0.0
    %1211 = vmatpush1.xpose.msra.mxu0 0.0
    %1212 = vmatprep.subr.mxu0 0.0
    %1213 = vmatpush1.xpose.msra.mxu0 0.0
    %1214 = vmatprep.subr.mxu0 0.0
    %1215 = vmatpush1.xpose.msra.mxu0 0.0
    %1216 = vmatprep.subr.mxu0 0.0
    %1217 = vmatpush1.xpose.msra.mxu0 0.0
    %1218 = vmatprep.subr.mxu0 0.0
    %1219 = vmatpush1.xpose.msra.mxu0 0.0
    %1220 = vmatprep.subr.mxu0 0.0
    %1221 = vmatpush1.xpose.msra.mxu0 0.0
    %1222 = vmatprep.subr.mxu0 0.0
    %1223 = vmatpush1.xpose.msra.mxu0 0.0
    %1224 = vmatprep.subr.mxu0 0.0
    %1225 = vmatpush1.xpose.msra.mxu0 0.0
    %1226 = vmatprep.subr.mxu0 0.0
    %1227 = vmatpush1.xpose.msra.mxu0 0.0
    %1228 = vmatprep.subr.mxu0 0.0
    %1229 = vmatpush1.xpose.msra.mxu0 0.0
    %1230 = vmatprep.subr.mxu0 0.0
    %1231 = vmatpush1.xpose.msra.mxu0 0.0
    %1232 = vmatprep.mubr.f32.mxu0 0.0
    %1233 = vmatmul.mubr.f32.gmra.mrb[0].mxu0 %v1164
    %v1234 = vpop.f32.mrb[0].mxu0
    %v1235 = vadd.f32 0.0, %v1234
    %v1236 = vpop.f32.mrb[0].mxu0
    %1237 = vdwg.mxu0
    %v1238 = vsel %vm157, %v1235, -inf
    %1239 = vmax.xlane.f32.xlu0 %v1238
    %v1240 = vpop.xlane.xlu0 %1239
    %v1241 = vsub.f32 %v1235, %v1240
    %v1242 = vmul.f32 %v1241, 1.442695
    %v1243 = vpow.pop %v1242
    %v1244 = vsel %vm157, %v1243, 0.0
    %1245 = vadd.xlane.f32.xlu0 %v1244
    %v1246 = vpop.xlane.xlu0 %1245
    %v1247 = vrcp.pop %v1246
    %v1248 = vmul.f32 %v1243, %v1247
    %1249 = vrot.lane.b32.xlu0 %v151, 48
    %v1250 = vpop.permute.xlu0 %1249
    %v1253 = vsel %vm157, %v1248, 0
    %1255 = vmatprep.subr.mxu0 0.0
    %1256 = vmatpush1.msra.mxu0 %v1250
    %1257 = vmatprep.subr.mxu0 0.0
    %1258 = vmatpush1.msra.mxu0 0.0
    %1259 = vmatprep.subr.mxu0 0.0
    %1260 = vmatpush1.msra.mxu0 0.0
    %1261 = vmatprep.subr.mxu0 0.0
    %1262 = vmatpush1.msra.mxu0 0.0
    %1263 = vmatprep.subr.mxu0 0.0
    %1264 = vmatpush1.msra.mxu0 0.0
    %1265 = vmatprep.subr.mxu0 0.0
    %1266 = vmatpush1.msra.mxu0 0.0
    %1267 = vmatprep.subr.mxu0 0.0
    %1268 = vmatpush1.msra.mxu0 0.0
    %1269 = vmatprep.subr.mxu0 0.0
    %1270 = vmatpush1.msra.mxu0 0.0
    %1271 = vmatprep.subr.mxu0 0.0
    %1272 = vmatpush1.msra.mxu0 0.0
    %1273 = vmatprep.subr.mxu0 0.0
    %1274 = vmatpush1.msra.mxu0 0.0
    %1275 = vmatprep.subr.mxu0 0.0
    %1276 = vmatpush1.msra.mxu0 0.0
    %1277 = vmatprep.subr.mxu0 0.0
    %1278 = vmatpush1.msra.mxu0 0.0
    %1279 = vmatprep.subr.mxu0 0.0
    %1280 = vmatpush1.msra.mxu0 0.0
    %1281 = vmatprep.subr.mxu0 0.0
    %1282 = vmatpush1.msra.mxu0 0.0
    %1283 = vmatprep.subr.mxu0 0.0
    %1284 = vmatpush1.msra.mxu0 0.0
    %1285 = vmatprep.subr.mxu0 0.0
    %1286 = vmatpush1.msra.mxu0 0.0
    %1287 = vmatprep.subr.mxu0 0.0
    %1288 = vmatpush1.msra.mxu0 0.0
    %1289 = vmatprep.subr.mxu0 0.0
    %1290 = vmatpush1.msra.mxu0 0.0
    %1291 = vmatprep.subr.mxu0 0.0
    %1292 = vmatpush1.msra.mxu0 0.0
    %1293 = vmatprep.subr.mxu0 0.0
    %1294 = vmatpush1.msra.mxu0 0.0
    %1295 = vmatprep.subr.mxu0 0.0
    %1296 = vmatpush1.msra.mxu0 0.0
    %1297 = vmatprep.subr.mxu0 0.0
    %1298 = vmatpush1.msra.mxu0 0.0
    %1299 = vmatprep.subr.mxu0 0.0
    %1300 = vmatpush1.msra.mxu0 0.0
    %1301 = vmatprep.subr.mxu0 0.0
    %1302 = vmatpush1.msra.mxu0 0.0
    %1303 = vmatprep.subr.mxu0 0.0
    %1304 = vmatpush1.msra.mxu0 0.0
    %1305 = vmatprep.subr.mxu0 0.0
    %1306 = vmatpush1.msra.mxu0 0.0
    %1307 = vmatprep.subr.mxu0 0.0
    %1308 = vmatpush1.msra.mxu0 0.0
    %1309 = vmatprep.subr.mxu0 0.0
    %1310 = vmatpush1.msra.mxu0 0.0
    %1311 = vmatprep.subr.mxu0 0.0
    %1312 = vmatpush1.msra.mxu0 0.0
    %1313 = vmatprep.subr.mxu0 0.0
    %1314 = vmatpush1.msra.mxu0 0.0
    %1315 = vmatprep.subr.mxu0 0.0
    %1316 = vmatpush1.msra.mxu0 0.0
    %1317 = vmatprep.subr.mxu0 0.0
    %1318 = vmatpush1.msra.mxu0 0.0
    %1319 = vmatprep.mubr.f32.mxu0 0.0
    %1320 = vmatmul.mubr.f32.gmra.mrb[0].mxu0 %v1253
    %v1321 = vpop.f32.mrb[0].mxu0
    %v1322 = vadd.f32 0.0, %v1321
    %v1323 = vpop.f32.mrb[0].mxu0
    %1324 = vdwg.mxu0
    %1325 = vrot.lane.b32.xlu0 %v151, 104
    %v1326 = vpop.permute.xlu0 %1325
    %1327 = vrot.lane.b32.xlu0 %v151, 72
    %v1328 = vpop.permute.xlu0 %1327
    %v1329 = vsel %vm157, %v1326, 0
    %v1331 = vsel %vm157, %v1328, 0
    %1333 = vmatprep.subr.mxu0 0.0
    %1334 = vmatpush1.xpose.msra.mxu0 %v1331
    %1335 = vmatprep.subr.mxu0 0.0
    %1336 = vmatpush1.xpose.msra.mxu0 0.0
    %1337 = vmatprep.subr.mxu0 0.0
    %1338 = vmatpush1.xpose.msra.mxu0 0.0
    %1339 = vmatprep.subr.mxu0 0.0
    %1340 = vmatpush1.xpose.msra.mxu0 0.0
    %1341 = vmatprep.subr.mxu0 0.0
    %1342 = vmatpush1.xpose.msra.mxu0 0.0
    %1343 = vmatprep.subr.mxu0 0.0
    %1344 = vmatpush1.xpose.msra.mxu0 0.0
    %1345 = vmatprep.subr.mxu0 0.0
    %1346 = vmatpush1.xpose.msra.mxu0 0.0
    %1347 = vmatprep.subr.mxu0 0.0
    %1348 = vmatpush1.xpose.msra.mxu0 0.0
    %1349 = vmatprep.subr.mxu0 0.0
    %1350 = vmatpush1.xpose.msra.mxu0 0.0
    %1351 = vmatprep.subr.mxu0 0.0
    %1352 = vmatpush1.xpose.msra.mxu0 0.0
    %1353 = vmatprep.subr.mxu0 0.0
    %1354 = vmatpush1.xpose.msra.mxu0 0.0
    %1355 = vmatprep.subr.mxu0 0.0
    %1356 = vmatpush1.xpose.msra.mxu0 0.0
    %1357 = vmatprep.subr.mxu0 0.0
    %1358 = vmatpush1.xpose.msra.mxu0 0.0
    %1359 = vmatprep.subr.mxu0 0.0
    %1360 = vmatpush1.xpose.msra.mxu0 0.0
    %1361 = vmatprep.subr.mxu0 0.0
    %1362 = vmatpush1.xpose.msra.mxu0 0.0
    %1363 = vmatprep.subr.mxu0 0.0
    %1364 = vmatpush1.xpose.msra.mxu0 0.0
    %1365 = vmatprep.subr.mxu0 0.0
    %1366 = vmatpush1.xpose.msra.mxu0 0.0
    %1367 = vmatprep.subr.mxu0 0.0
    %1368 = vmatpush1.xpose.msra.mxu0 0.0
    %1369 = vmatprep.subr.mxu0 0.0
    %1370 = vmatpush1.xpose.msra.mxu0 0.0
    %1371 = vmatprep.subr.mxu0 0.0
    %1372 = vmatpush1.xpose.msra.mxu0 0.0
    %1373 = vmatprep.subr.mxu0 0.0
    %1374 = vmatpush1.xpose.msra.mxu0 0.0
    %1375 = vmatprep.subr.mxu0 0.0
    %1376 = vmatpush1.xpose.msra.mxu0 0.0
    %1377 = vmatprep.subr.mxu0 0.0
    %1378 = vmatpush1.xpose.msra.mxu0 0.0
    %1379 = vmatprep.subr.mxu0 0.0
    %1380 = vmatpush1.xpose.msra.mxu0 0.0
    %1381 = vmatprep.subr.mxu0 0.0
    %1382 = vmatpush1.xpose.msra.mxu0 0.0
    %1383 = vmatprep.subr.mxu0 0.0
    %1384 = vmatpush1.xpose.msra.mxu0 0.0
    %1385 = vmatprep.subr.mxu0 0.0
    %1386 = vmatpush1.xpose.msra.mxu0 0.0
    %1387 = vmatprep.subr.mxu0 0.0
    %1388 = vmatpush1.xpose.msra.mxu0 0.0
    %1389 = vmatprep.subr.mxu0 0.0
    %1390 = vmatpush1.xpose.msra.mxu0 0.0
    %1391 = vmatprep.subr.mxu0 0.0
    %1392 = vmatpush1.xpose.msra.mxu0 0.0
    %1393 = vmatprep.subr.mxu0 0.0
    %1394 = vmatpush1.xpose.msra.mxu0 0.0
    %1395 = vmatprep.subr.mxu0 0.0
    %1396 = vmatpush1.xpose.msra.mxu0 0.0
    %1397 = vmatprep.mubr.f32.mxu0 0.0
    %1398 = vmatmul.mubr.f32.gmra.mrb[0].mxu0 %v1329
    %v1399 = vpop.f32.mrb[0].mxu0
    %v1400 = vadd.f32 0.0, %v1399
    %v1401 = vpop.f32.mrb[0].mxu0
    %1402 = vdwg.mxu0
    %v1403 = vsel %vm157, %v1400, -inf
    %1404 = vmax.xlane.f32.xlu0 %v1403
    %v1405 = vpop.xlane.xlu0 %1404
    %v1406 = vsub.f32 %v1400, %v1405
    %v1407 = vmul.f32 %v1406, 1.442695
    %v1408 = vpow.pop %v1407
    %v1409 = vsel %vm157, %v1408, 0.0
    %1410 = vadd.xlane.f32.xlu0 %v1409
    %v1411 = vpop.xlane.xlu0 %1410
    %v1412 = vrcp.pop %v1411
    %v1413 = vmul.f32 %v1408, %v1412
    %1414 = vrot.lane.b32.xlu0 %v151, 40
    %v1415 = vpop.permute.xlu0 %1414
    %v1418 = vsel %vm157, %v1413, 0
    %1420 = vmatprep.subr.mxu0 0.0
    %1421 = vmatpush1.msra.mxu0 %v1415
    %1422 = vmatprep.subr.mxu0 0.0
    %1423 = vmatpush1.msra.mxu0 0.0
    %1424 = vmatprep.subr.mxu0 0.0
    %1425 = vmatpush1.msra.mxu0 0.0
    %1426 = vmatprep.subr.mxu0 0.0
    %1427 = vmatpush1.msra.mxu0 0.0
    %1428 = vmatprep.subr.mxu0 0.0
    %1429 = vmatpush1.msra.mxu0 0.0
    %1430 = vmatprep.subr.mxu0 0.0
    %1431 = vmatpush1.msra.mxu0 0.0
    %1432 = vmatprep.subr.mxu0 0.0
    %1433 = vmatpush1.msra.mxu0 0.0
    %1434 = vmatprep.subr.mxu0 0.0
    %1435 = vmatpush1.msra.mxu0 0.0
    %1436 = vmatprep.subr.mxu0 0.0
    %1437 = vmatpush1.msra.mxu0 0.0
    %1438 = vmatprep.subr.mxu0 0.0
    %1439 = vmatpush1.msra.mxu0 0.0
    %1440 = vmatprep.subr.mxu0 0.0
    %1441 = vmatpush1.msra.mxu0 0.0
    %1442 = vmatprep.subr.mxu0 0.0
    %1443 = vmatpush1.msra.mxu0 0.0
    %1444 = vmatprep.subr.mxu0 0.0
    %1445 = vmatpush1.msra.mxu0 0.0
    %1446 = vmatprep.subr.mxu0 0.0
    %1447 = vmatpush1.msra.mxu0 0.0
    %1448 = vmatprep.subr.mxu0 0.0
    %1449 = vmatpush1.msra.mxu0 0.0
    %1450 = vmatprep.subr.mxu0 0.0
    %1451 = vmatpush1.msra.mxu0 0.0
    %1452 = vmatprep.subr.mxu0 0.0
    %1453 = vmatpush1.msra.mxu0 0.0
    %1454 = vmatprep.subr.mxu0 0.0
    %1455 = vmatpush1.msra.mxu0 0.0
    %1456 = vmatprep.subr.mxu0 0.0
    %1457 = vmatpush1.msra.mxu0 0.0
    %1458 = vmatprep.subr.mxu0 0.0
    %1459 = vmatpush1.msra.mxu0 0.0
    %1460 = vmatprep.subr.mxu0 0.0
    %1461 = vmatpush1.msra.mxu0 0.0
    %1462 = vmatprep.subr.mxu0 0.0
    %1463 = vmatpush1.msra.mxu0 0.0
    %1464 = vmatprep.subr.mxu0 0.0
    %1465 = vmatpush1.msra.mxu0 0.0
    %1466 = vmatprep.subr.mxu0 0.0
    %1467 = vmatpush1.msra.mxu0 0.0
    %1468 = vmatprep.subr.mxu0 0.0
    %1469 = vmatpush1.msra.mxu0 0.0
    %1470 = vmatprep.subr.mxu0 0.0
    %1471 = vmatpush1.msra.mxu0 0.0
    %1472 = vmatprep.subr.mxu0 0.0
    %1473 = vmatpush1.msra.mxu0 0.0
    %1474 = vmatprep.subr.mxu0 0.0
    %1475 = vmatpush1.msra.mxu0 0.0
    %1476 = vmatprep.subr.mxu0 0.0
    %1477 = vmatpush1.msra.mxu0 0.0
    %1478 = vmatprep.subr.mxu0 0.0
    %1479 = vmatpush1.msra.mxu0 0.0
    %1480 = vmatprep.subr.mxu0 0.0
    %1481 = vmatpush1.msra.mxu0 0.0
    %1482 = vmatprep.subr.mxu0 0.0
    %1483 = vmatpush1.msra.mxu0 0.0
    %1484 = vmatprep.mubr.f32.mxu0 0.0
    %1485 = vmatmul.mubr.f32.gmra.mrb[0].mxu0 %v1418
    %v1486 = vpop.f32.mrb[0].mxu0
    %v1487 = vadd.f32 0.0, %v1486
    %v1488 = vpop.f32.mrb[0].mxu0
    %1489 = vdwg.mxu0
    %1491 = vrot.lane.b32.xlu0 %v1157, 8
    %v1492 = vpop.permute.xlu0 %1491
    %1495 = vrot.lane.b32.xlu0 %v1322, 16
    %v1496 = vpop.permute.xlu0 %1495
    %1499 = vrot.lane.b32.xlu0 %v1487, 24
    %v1500 = vpop.permute.xlu0 %1499
    %v1502 = vsel %vm157, %v992, %v1492
    %v1503 = vsel %vm827, %v1502, %v1496
    %v1504 = vsel %vm829, %v1503, %v1500
    %v1505 = vlaneseq
    %v1506 = vshrl.u32 %v1505, 7
    %v1507 = vsub.s32 3, %v1506
    %v1508 = vrot.slane %v28, %v1507
    %1513 = vrot.lane.b32.xlu0 %v20, 32
    %v1514 = vpop.permute.xlu0 %1513
    %1515 = vrot.lane.b32.xlu0 %v22, 32
    %v1516 = vpop.permute.xlu0 %1515
    %1517 = vrot.lane.b32.xlu0 %v24, 32
    %v1518 = vpop.permute.xlu0 %1517
    %1519 = vrot.lane.b32.xlu0 %v26, 32
    %v1520 = vpop.permute.xlu0 %1519
    %v1526 = vsel %vm29, %v830, 0
    %v1529 = vsel %vm29, %v1504, 0
    %1531 = vmatprep.subr.mxu0 0.0
    %1532 = vmatpush1.msra.mxu0 %v1514
    %1533 = vmatprep.subr.mxu0 0.0
    %1534 = vmatpush1.msra.mxu0 %v1516
    %1535 = vmatprep.subr.mxu0 0.0
    %1536 = vmatpush1.msra.mxu0 %v1518
    %1537 = vmatprep.subr.mxu0 0.0
    %1538 = vmatpush1.msra.mxu0 %v1520
    %1539 = vmatprep.subr.mxu0 0.0
    %1540 = vmatpush1.msra.mxu0 0.0
    %1541 = vmatprep.subr.mxu0 0.0
    %1542 = vmatpush1.msra.mxu0 0.0
    %1543 = vmatprep.subr.mxu0 0.0
    %1544 = vmatpush1.msra.mxu0 0.0
    %1545 = vmatprep.subr.mxu0 0.0
    %1546 = vmatpush1.msra.mxu0 0.0
    %1547 = vmatprep.subr.mxu0 0.0
    %1548 = vmatpush1.msra.mxu0 0.0
    %1549 = vmatprep.subr.mxu0 0.0
    %1550 = vmatpush1.msra.mxu0 0.0
    %1551 = vmatprep.subr.mxu0 0.0
    %1552 = vmatpush1.msra.mxu0 0.0
    %1553 = vmatprep.subr.mxu0 0.0
    %1554 = vmatpush1.msra.mxu0 0.0
    %1555 = vmatprep.subr.mxu0 0.0
    %1556 = vmatpush1.msra.mxu0 0.0
    %1557 = vmatprep.subr.mxu0 0.0
    %1558 = vmatpush1.msra.mxu0 0.0
    %1559 = vmatprep.subr.mxu0 0.0
    %1560 = vmatpush1.msra.mxu0 0.0
    %1561 = vmatprep.subr.mxu0 0.0
    %1562 = vmatpush1.msra.mxu0 0.0
    %1563 = vmatprep.subr.mxu0 0.0
    %1564 = vmatpush1.msra.mxu0 0.0
    %1565 = vmatprep.subr.mxu0 0.0
    %1566 = vmatpush1.msra.mxu0 0.0
    %1567 = vmatprep.subr.mxu0 0.0
    %1568 = vmatpush1.msra.mxu0 0.0
    %1569 = vmatprep.subr.mxu0 0.0
    %1570 = vmatpush1.msra.mxu0 0.0
    %1571 = vmatprep.subr.mxu0 0.0
    %1572 = vmatpush1.msra.mxu0 0.0
    %1573 = vmatprep.subr.mxu0 0.0
    %1574 = vmatpush1.msra.mxu0 0.0
    %1575 = vmatprep.subr.mxu0 0.0
    %1576 = vmatpush1.msra.mxu0 0.0
    %1577 = vmatprep.subr.mxu0 0.0
    %1578 = vmatpush1.msra.mxu0 0.0
    %1579 = vmatprep.subr.mxu0 0.0
    %1580 = vmatpush1.msra.mxu0 0.0
    %1581 = vmatprep.subr.mxu0 0.0
    %1582 = vmatpush1.msra.mxu0 0.0
    %1583 = vmatprep.subr.mxu0 0.0
    %1584 = vmatpush1.msra.mxu0 0.0
    %1585 = vmatprep.subr.mxu0 0.0
    %1586 = vmatpush1.msra.mxu0 0.0
    %1587 = vmatprep.subr.mxu0 0.0
    %1588 = vmatpush1.msra.mxu0 0.0
    %1589 = vmatprep.subr.mxu0 0.0
    %1590 = vmatpush1.msra.mxu0 0.0
    %1591 = vmatprep.subr.mxu0 0.0
    %1592 = vmatpush1.msra.mxu0 0.0
    %1593 = vmatprep.subr.mxu0 0.0
    %1594 = vmatpush1.msra.mxu0 0.0
    %1595 = vmatprep.mubr.f32.mxu0 0.0
    %1596 = vmatmul.mubr.f32.gmra.mrb[0].mxu0 %v1526
    %v1597 = vpop.f32.mrb[0].mxu0
    %v1598 = vadd.f32 %v1508, %v1597
    %v1599 = vpop.f32.mrb[0].mxu0
    %1600 = vmatprep.mubr.f32.mxu0 0.0
    %1601 = vmatmul.mubr.f32.gmra.mrb[0].mxu0 %v1529
    %v1602 = vpop.f32.mrb[0].mxu0
    %v1603 = vadd.f32 %v1508, %v1602
    %v1604 = vpop.f32.mrb[0].mxu0
    %1605 = vdwg.mxu0
    %v1606 = vadd.f32 %v1598, %v18
    %v1607 = vadd.f32 %v1603, %v19
    %v1608 = vsel %vm29, %v1606, 0.0
    %1609 = vadd.xlane.f32.xlu0 %v1608
    %v1610 = vpop.xlane.xlu0 %1609
    %v1611 = vsel %vm29, %v1607, 0.0
    %1612 = vadd.xlane.f32.xlu0 %v1611
    %v1613 = vpop.xlane.xlu0 %1612
    %v1614 = vmul.f32 %v1610, %v36
    %v1615 = vmul.f32 %v1613, %v36
    %v1616 = vsub.f32 %v1606, %v1614
    %v1617 = vsub.f32 %v1607, %v1615
    %v1618 = vmul.f32 %v1616, %v1616
    %v1619 = vmul.f32 %v1617, %v1617
    %v1620 = vsel %vm29, %v1618, 0.0
    %1621 = vadd.xlane.f32.xlu0 %v1620
    %v1622 = vpop.xlane.xlu0 %1621
    %v1623 = vsel %vm29, %v1619, 0.0
    %1624 = vadd.xlane.f32.xlu0 %v1623
    %v1625 = vpop.xlane.xlu0 %1624
    %v1626 = vmul.f32 %v1622, %v36
    %v1627 = vmul.f32 %v1625, %v36
    %v1628 = vadd.f32 %v1626, 1e-05
    %v1629 = vadd.f32 %v1627, 1e-05
    %v1630 = vrsqrt.pop %v1628
    %v1631 = vrsqrt.pop %v1629
    %v1632 = vmul.f32 %v1616, %v1630
    %v1633 = vmul.f32 %v1617, %v1631
    %v1634 = vlaneseq
    %v1635 = vshrl.u32 %v1634, 7
    %v1636 = vsub.s32 4, %v1635
    %v1637 = vrot.slane %v28, %v1636
    %v1638 = vmul.f32 %v1632, %v1637
    %v1639 = vmul.f32 %v1633, %v1637
    %v1640 = vlaneseq
    %v1641 = vshrl.u32 %v1640, 7
    %v1642 = vsub.s32 5, %v1641
    %v1643 = vrot.slane %v28, %v1642
    %v1644 = vadd.f32 %v1638, %v1643
    %v1645 = vadd.f32 %v1639, %v1643
    %v1646 = vlaneseq
    %v1647 = vshrl.u32 %v1646, 7
    %v1648 = vsub.s32 6, %v1647
    %v1649 = vrot.slane %v28, %v1648
    %v1651 = vsel %vm29, %v1644, 0
    %v1654 = vsel %vm29, %v1645, 0
    %1656 = vmatprep.subr.mxu0 0.0
    %1657 = vmatpush1.msra.mxu0 %v21
    %1658 = vmatprep.subr.mxu0 0.0
    %1659 = vmatpush1.msra.mxu0 %v23
    %1660 = vmatprep.subr.mxu0 0.0
    %1661 = vmatpush1.msra.mxu0 %v25
    %1662 = vmatprep.subr.mxu0 0.0
    %1663 = vmatpush1.msra.mxu0 %v27
    %1664 = vmatprep.subr.mxu0 0.0
    %1665 = vmatpush1.msra.mxu0 0.0
    %1666 = vmatprep.subr.mxu0 0.0
    %1667 = vmatpush1.msra.mxu0 0.0
    %1668 = vmatprep.subr.mxu0 0.0
    %1669 = vmatpush1.msra.mxu0 0.0
    %1670 = vmatprep.subr.mxu0 0.0
    %1671 = vmatpush1.msra.mxu0 0.0
    %1672 = vmatprep.subr.mxu0 0.0
    %1673 = vmatpush1.msra.mxu0 0.0
    %1674 = vmatprep.subr.mxu0 0.0
    %1675 = vmatpush1.msra.mxu0 0.0
    %1676 = vmatprep.subr.mxu0 0.0
    %1677 = vmatpush1.msra.mxu0 0.0
    %1678 = vmatprep.subr.mxu0 0.0
    %1679 = vmatpush1.msra.mxu0 0.0
    %1680 = vmatprep.subr.mxu0 0.0
    %1681 = vmatpush1.msra.mxu0 0.0
    %1682 = vmatprep.subr.mxu0 0.0
    %1683 = vmatpush1.msra.mxu0 0.0
    %1684 = vmatprep.subr.mxu0 0.0
    %1685 = vmatpush1.msra.mxu0 0.0
    %1686 = vmatprep.subr.mxu0 0.0
    %1687 = vmatpush1.msra.mxu0 0.0
    %1688 = vmatprep.subr.mxu0 0.0
    %1689 = vmatpush1.msra.mxu0 0.0
    %1690 = vmatprep.subr.mxu0 0.0
    %1691 = vmatpush1.msra.mxu0 0.0
    %1692 = vmatprep.subr.mxu0 0.0
    %1693 = vmatpush1.msra.mxu0 0.0
    %1694 = vmatprep.subr.mxu0 0.0
    %1695 = vmatpush1.msra.mxu0 0.0
    %1696 = vmatprep.subr.mxu0 0.0
    %1697 = vmatpush1.msra.mxu0 0.0
    %1698 = vmatprep.subr.mxu0 0.0
    %1699 = vmatpush1.msra.mxu0 0.0
    %1700 = vmatprep.subr.mxu0 0.0
    %1701 = vmatpush1.msra.mxu0 0.0
    %1702 = vmatprep.subr.mxu0 0.0
    %1703 = vmatpush1.msra.mxu0 0.0
    %1704 = vmatprep.subr.mxu0 0.0
    %1705 = vmatpush1.msra.mxu0 0.0
    %1706 = vmatprep.subr.mxu0 0.0
    %1707 = vmatpush1.msra.mxu0 0.0
    %1708 = vmatprep.subr.mxu0 0.0
    %1709 = vmatpush1.msra.mxu0 0.0
    %1710 = vmatprep.subr.mxu0 0.0
    %1711 = vmatpush1.msra.mxu0 0.0
    %1712 = vmatprep.subr.mxu0 0.0
    %1713 = vmatpush1.msra.mxu0 0.0
    %1714 = vmatprep.subr.mxu0 0.0
    %1715 = vmatpush1.msra.mxu0 0.0
    %1716 = vmatprep.subr.mxu0 0.0
    %1717 = vmatpush1.msra.mxu0 0.0
    %1718 = vmatprep.subr.mxu0 0.0
    %1719 = vmatpush1.msra.mxu0 0.0
    %1720 = vmatprep.mubr.f32.mxu0 0.0
    %1721 = vmatmul.mubr.f32.gmra.mrb[0].mxu0 %v1651
    %v1722 = vpop.f32.mrb[0].mxu0
    %v1723 = vadd.f32 %v1649, %v1722
    %v1724 = vpop.f32.mrb[0].mxu0
    %1725 = vmatprep.mubr.f32.mxu0 0.0
    %1726 = vmatmul.mubr.f32.gmra.mrb[0].mxu0 %v1654
    %v1727 = vpop.f32.mrb[0].mxu0
    %v1728 = vadd.f32 %v1649, %v1727
    %v1729 = vpop.f32.mrb[0].mxu0
    %1730 = vdwg.mxu0
    %v1731 = vmul.f32 %v1723, 0.5
    %v1732 = vmul.f32 %v1728, 0.5
    %v1733 = vmul.f32 %v1723, 0.70710677
    %v1734 = vmul.f32 %v1728, 0.70710677
    %v1735 = verf.f32.pop %v1733
    %v1736 = verf.f32.pop %v1734
    %v1737 = vadd.f32 %v1735, 1.0
    %v1738 = vadd.f32 %v1736, 1.0
    %v1739 = vmul.f32 %v1731, %v1737
    %v1740 = vmul.f32 %v1732, %v1738
    %v1741 = vld [vmem:[%s2] sm:$0xff]
    %v1742 = vld [vmem:[%s2 + $0x8] sm:$0xff]
    %v1743 = vld [vmem:[%s2 + $0x10] sm:$0xff]
    %v1744 = vld [vmem:[%s2 + $0x18] sm:$0xff]
    %v1745 = vld [vmem:[%s2 + $0x20] sm:$0xff]
    %v1746 = vld [vmem:[%s2 + $0x28] sm:$0xff]
    %v1747 = vld [vmem:[%s2 + $0x30] sm:$0xff]
    %v1748 = vld [vmem:[%s2 + $0x38] sm:$0xff]
    %v1749 = vld [vmem:[%s2 + $0x40] sm:$0xff]
    %v1750 = vld [vmem:[%s2 + $0x48] sm:$0xff]
    %v1751 = vld [vmem:[%s2 + $0x50] sm:$0xff]
    %v1752 = vld [vmem:[%s2 + $0x58] sm:$0xff]
    %v1753 = vld [vmem:[%s2 + $0x60] sm:$0xff]
    %v1754 = vld [vmem:[%s2 + $0x68] sm:$0xff]
    %v1755 = vld [vmem:[%s2 + $0x70] sm:$0xff]
    %v1756 = vld [vmem:[%s2 + $0x78] sm:$0xff]
    %v1757 = vlaneseq
    %v1758 = vshrl.u32 %v1757, 7
    %v1759 = vsub.s32 7, %v1758
    %v1760 = vrot.slane %v28, %v1759
    %1761 = vmatprep.subr.mxu0 0.0
    %1762 = vmatpush1.msra.mxu0 %v1741
    %1763 = vmatprep.subr.mxu0 0.0
    %1764 = vmatpush1.msra.mxu0 %v1742
    %1765 = vmatprep.subr.mxu0 0.0
    %1766 = vmatpush1.msra.mxu0 %v1743
    %1767 = vmatprep.subr.mxu0 0.0
    %1768 = vmatpush1.msra.mxu0 %v1744
    %1769 = vmatprep.subr.mxu0 0.0
    %1770 = vmatpush1.msra.mxu0 %v1745
    %1771 = vmatprep.subr.mxu0 0.0
    %1772 = vmatpush1.msra.mxu0 %v1746
    %1773 = vmatprep.subr.mxu0 0.0
    %1774 = vmatpush1.msra.mxu0 %v1747
    %1775 = vmatprep.subr.mxu0 0.0
    %1776 = vmatpush1.msra.mxu0 %v1748
    %1777 = vmatprep.subr.mxu0 0.0
    %1778 = vmatpush1.msra.mxu0 %v1749
    %1779 = vmatprep.subr.mxu0 0.0
    %1780 = vmatpush1.msra.mxu0 %v1750
    %1781 = vmatprep.subr.mxu0 0.0
    %1782 = vmatpush1.msra.mxu0 %v1751
    %1783 = vmatprep.subr.mxu0 0.0
    %1784 = vmatpush1.msra.mxu0 %v1752
    %1785 = vmatprep.subr.mxu0 0.0
    %1786 = vmatpush1.msra.mxu0 %v1753
    %1787 = vmatprep.subr.mxu0 0.0
    %1788 = vmatpush1.msra.mxu0 %v1754
    %1789 = vmatprep.subr.mxu0 0.0
    %1790 = vmatpush1.msra.mxu0 %v1755
    %1791 = vmatprep.subr.mxu0 0.0
    %1792 = vmatpush1.msra.mxu0 %v1756
    %1793 = vmatprep.subr.mxu0 0.0
    %1794 = vmatpush1.msra.mxu0 0.0
    %1795 = vmatprep.subr.mxu0 0.0
    %1796 = vmatpush1.msra.mxu0 0.0
    %1797 = vmatprep.subr.mxu0 0.0
    %1798 = vmatpush1.msra.mxu0 0.0
    %1799 = vmatprep.subr.mxu0 0.0
    %1800 = vmatpush1.msra.mxu0 0.0
    %1801 = vmatprep.subr.mxu0 0.0
    %1802 = vmatpush1.msra.mxu0 0.0
    %1803 = vmatprep.subr.mxu0 0.0
    %1804 = vmatpush1.msra.mxu0 0.0
    %1805 = vmatprep.subr.mxu0 0.0
    %1806 = vmatpush1.msra.mxu0 0.0
    %1807 = vmatprep.subr.mxu0 0.0
    %1808 = vmatpush1.msra.mxu0 0.0
    %1809 = vmatprep.subr.mxu0 0.0
    %1810 = vmatpush1.msra.mxu0 0.0
    %1811 = vmatprep.subr.mxu0 0.0
    %1812 = vmatpush1.msra.mxu0 0.0
    %1813 = vmatprep.subr.mxu0 0.0
    %1814 = vmatpush1.msra.mxu0 0.0
    %1815 = vmatprep.subr.mxu0 0.0
    %1816 = vmatpush1.msra.mxu0 0.0
    %1817 = vmatprep.subr.mxu0 0.0
    %1818 = vmatpush1.msra.mxu0 0.0
    %1819 = vmatprep.subr.mxu0 0.0
    %1820 = vmatpush1.msra.mxu0 0.0
    %1821 = vmatprep.subr.mxu0 0.0
    %1822 = vmatpush1.msra.mxu0 0.0
    %1823 = vmatprep.subr.mxu0 0.0
    %1824 = vmatpush1.msra.mxu0 0.0
    %1825 = vmatprep.mubr.f32.mxu0 0.0
    %1826 = vmatmul.mubr.f32.gmra.mrb[0].mxu0 %v1739
    %v1827 = vpop.f32.mrb[0].mxu0
    %v1828 = vadd.f32 %v1760, %v1827
    %v1829 = vpop.f32.mrb[0].mxu0
    %1830 = vmatprep.mubr.f32.mxu0 0.0
    %1831 = vmatmul.mubr.f32.gmra.mrb[0].mxu0 %v1740
    %v1832 = vpop.f32.mrb[0].mxu0
    %v1833 = vadd.f32 %v1760, %v1832
    %v1834 = vpop.f32.mrb[0].mxu0
    %1835 = vdwg.mxu0
    %v1836 = vadd.f32 %v1828, %v1606
    %v1837 = vadd.f32 %v1833, %v1607
    %1838 = vst.msk [vmem:[#allocation2] sm:$0xff] %vm29, %v1836
    %1839 = vst.msk [vmem:[#allocation2 + $0x8] sm:$0xff] %vm29, %v1837
    // Predicated region
    $region18: #{tpu_custom_call.1} parent=1 // pred_check
      _
    $region19: #{tpu_custom_call.1} parent=1 // pred_check_branch
      %1841 = sbr.rel (0) target = $region21
    $region20: #{tpu_custom_call.1} parent=1 // pred_region
      %s1843 = ssub.s32 256, 256
      %1844 = vsyncadd [#allocation3], %s1843
      %s1845 = sshll.u32 [#allocation2], 4
      %s1846 = int_to_ptr.vmem [resolvable:$true] %s1845
      %1851 = dma.vmem_to_hbm [thread:$0]  %s1846, 256, %s4, [#allocation3], 128, 128, 8
    $region21: #{tpu_custom_call.1} parent=1 // pred_fallthru
      _
    // Predicated region
    $region22: #{tpu_custom_call.1} parent=1 // pred_check
      _
    $region23: #{tpu_custom_call.1} parent=1 // pred_check_branch
      %1853 = sbr.rel (0) target = $region25
    $region24: #{tpu_custom_call.1} parent=1 // pred_region
      %1854 = dma.done [#allocation3], 256
    $region25: #{tpu_custom_call.1} parent=1 // pred_fallthru
      _
    %1855 = vsyncpa [#allocation3], 1

</llo_original>
